<compile_context>
chip_gen: v6e
topology: v6e:2x2x1
jax: 0.10.0
libtpu: 0.0.40
codegen_flags: <defaults>
</compile_context>

<pallas_src>
import functools

import jax
import jax.numpy as jnp
from jax.experimental import pallas as pl
from jax.experimental.pallas import tpu as pltpu


# ----------------------------------------------------------------------------- kernel
def _critic_head_kernel(nodes_ref, a_ref, n_ref,
                        wg_ref, wa_ref, wn_ref, b1_ref,
                        w2_ref, b2_ref, w3_ref, b3_ref, o_ref):
    """Fused mean_nodes -> concat -> Linear_3 for one batch tile (natural layout).

    nodes_ref : [bb, npg*hidden]  per-graph node embeddings, flattened row-major
    a_ref     : [bb, 1]           last_action_node
    n_ref     : [bb, in_dim]      last_node
    wg_ref    : [npg*hidden, hidden]  = kron(ones(npg,1)/npg, W1[:, :hidden].T)
                (mean_nodes folded into Dense1's hg columns)
    wa_ref    : [1, hidden]       W1[:, hidden:hidden+1].T   (last_action column)
    wn_ref    : [in_dim, hidden]  W1[:, hidden+1:].T         (last_node columns)
    b1/b2     : [1, hidden]; w3 : [1, hidden]; b3 : [1, 1]
    o_ref     : [bb, 1]
    """
    # Dense1 with mean_nodes + concat folded away (no concatenate, no hg materialization).
    z1 = jnp.dot(nodes_ref[...], wg_ref[...], preferred_element_type=jnp.float32)
    z1 = z1 + a_ref[...] * wa_ref[...]                 # rank-1 column -> VPU broadcast-mul
    z1 = z1 + jnp.dot(n_ref[...], wn_ref[...], preferred_element_type=jnp.float32)
    h1 = jnp.tanh(z1 + b1_ref[...])                    # [bb, hidden]

    # Dense2 + tanh.
    h2 = jnp.tanh(jnp.dot(h1, w2_ref[...], preferred_element_type=jnp.float32)
                  + b2_ref[...])                       # [bb, hidden]

    # Dense3 (out_dim == 1): VPU multiply + lane reduction instead of a padded MXU tile.
    out = jnp.sum(h2 * w3_ref[...], axis=1, keepdims=True) + b3_ref[...]
    o_ref[...] = out.astype(o_ref.dtype)               # [bb, 1] (tiny masked store, negligible)


# ----------------------------------------------------------------------- tiling helpers
def _round_up(x, m):
    return ((x + m - 1) // m) * m


def _tensorcores_per_device():
    """Best-effort TC-per-device count; 1 for v5e/v6e, 2 for dual-core generations."""
    try:
        kind = jax.devices()[0].device_kind.lower()
    except Exception:
        return 1
    for tag in ("v7", "7x", "v5p", "v4"):
        if tag in kind:
            return 2
    return 1


def _auto_block_b(batch):
    n_tc = _tensorcores_per_device()
    if n_tc <= 1 or batch <= 128:
        return batch                         # single grid step: grid is a serial loop on 1-TC chips
    return min(batch, _round_up(pl.cdiv(batch, n_tc), 128))   # one lane-aligned tile per core


# --------------------------------------------------------------------- param preparation
def prepare_params(params, nodes_per_graph=1):
    """One-time (off the hot path) fold of mean_nodes + concat into the Linear_3 weights.

    params: PyTorch nn.Linear layout — w_i: [out, in], b_i: [out].
    """
    w1, b1, w2, b2, w3, b3 = params
    hidden = w1.shape[0]                     # Dense1 out == GGN hidden == hg dim
    assert w3.shape[0] == 1, "CriticSqueeze head has out_dim == 1"

    w1_hg = w1[:, :hidden]                   # [hidden, hidden]
    w1_a = w1[:, hidden:hidden + 1]          # [hidden, 1]
    w1_n = w1[:, hidden + 1:]                # [hidden, in_dim]

    # mean over nodes_per_graph folded into a tiled/scaled weight block.
    wg = jnp.tile(w1_hg.T, (nodes_per_graph, 1)) / float(nodes_per_graph)  # [npg*hidden, hidden]
    return (wg,
            w1_a.T,                          # [1, hidden]
            w1_n.T,                          # [in_dim, hidden]
            b1.reshape(1, -1),               # [1, hidden]
            w2.T,                            # [hidden, hidden]
            b2.reshape(1, -1),               # [1, hidden]
            w3.reshape(1, -1),               # [1, hidden]
            b3.reshape(1, -1))               # [1, 1]


def mean_nodes_segmented(node_h, segment_ids, num_graphs):
    """dgl.mean_nodes for ragged graphs (empty segments guarded against 0/0 -> NaN).

    Use this outside the kernel when graphs have variable node counts, then call
    critic_squeeze_head(result, ..., nodes_per_graph=1).
    """
    sums = jax.ops.segment_sum(node_h, segment_ids, num_segments=num_graphs)
    counts = jax.ops.segment_sum(jnp.ones((node_h.shape[0], 1), node_h.dtype),
                                 segment_ids, num_segments=num_graphs)
    return sums / jnp.maximum(counts, 1)


# --------------------------------------------------------------------------- forward pass
@functools.partial(jax.jit, static_argnames=("nodes_per_graph", "block_b"))
def critic_squeeze_head(node_h, last_action_node, last_node, prepared,
                        nodes_per_graph=1, block_b=None):
    """CriticSqueeze.forward minus the graph conv, as ONE fused pallas_call.

    node_h stands in for h = relu(GGN(graph, atomic, edge_type)) with a uniform,
    static nodes_per_graph (graph-major row order). For ragged graphs, compute hg
    with mean_nodes_segmented and pass it here with nodes_per_graph=1.
    """
    # TODO(synk): dgl.nn.GatedGraphConv (edge-typed sparse message passing + GRU, 5 steps)
    # has no clean Pallas equivalent here; its relu'd output is supplied as node_h.
    wg, wa, wn, b1, w2t, b2, w3, b3 = prepared
    B = last_action_node.shape[0]
    hidden = node_h.shape[1]
    in_dim = last_node.shape[1]
    assert node_h.shape[0] == B * nodes_per_graph, (node_h.shape, B, nodes_per_graph)

    G = nodes_per_graph * hidden
    nodes2d = node_h.reshape(B, G)           # row-major merge -> bitcast, not a copy

    bb = block_b if block_b is not None else _auto_block_b(B)
    grid = (pl.cdiv(B, bb),)

    full = lambda shape: pl.BlockSpec(shape, lambda i: (0, 0))
    batch = lambda cols: pl.BlockSpec((bb, cols), lambda i: (i, 0))

    return pl.pallas_call(
        _critic_head_kernel,
        out_shape=jax.ShapeDtypeStruct((B, 1), node_h.dtype),
        grid_spec=pltpu.PrefetchScalarGridSpec(
            num_scalar_prefetch=0,
            grid=grid,
            in_specs=[
                batch(G),                    # node embeddings (per-graph flattened)
                batch(1),                    # last_action_node
                batch(in_dim),               # last_node
                full(wg.shape), full(wa.shape), full(wn.shape), full(b1.shape),
                full(w2t.shape), full(b2.shape), full(w3.shape), full(b3.shape),
            ],
            out_specs=pl.BlockSpec((bb, 1), lambda i: (i, 0)),
        ),
        compiler_params=pltpu.CompilerParams(
            dimension_semantics=("parallel",),
        ),
    )(nodes2d, last_action_node, last_node, wg, wa, wn, b1, w2t, b2, w3, b3)


# ------------------------------------------------------------------------------ reference
def init_params(key, in_dim, hidden_dim, out_dim, dtype=jnp.float32):
    """nn.Linear-style U(-1/sqrt(fan_in), 1/sqrt(fan_in)); weights [out, in], biases [out]."""
    ks = jax.random.split(key, 6)

    def linear(kw, kb, fan_in, fan_out):
        bound = 1.0 / float(fan_in) ** 0.5
        w = jax.random.uniform(kw, (fan_out, fan_in), dtype, -bound, bound)
        b = jax.random.uniform(kb, (fan_out,), dtype, -bound, bound)
        return w, b

    w1, b1 = linear(ks[0], ks[1], in_dim, hidden_dim)
    w2, b2 = linear(ks[2], ks[3], hidden_dim, hidden_dim)
    w3, b3 = linear(ks[4], ks[5], hidden_dim, out_dim)
    return w1, b1, w2, b2, w3, b3


def _linear3_ref(x, w1, b1, w2, b2, w3, b3):
    h = jnp.tanh(x @ w1.T + b1)
    h = jnp.tanh(h @ w2.T + b2)
    return h @ w3.T + b3


if __name__ == "__main__":
    key = jax.random.PRNGKey(0)
    k_h, k_a, k_n, k_p = jax.random.split(key, 4)

    in_dim, hidden_dim = 8, 32               # atomic-feature dim / GGN hidden dim
    num_graphs = 256
    nodes_per_graph = 4
    num_nodes = num_graphs * nodes_per_graph

    # Stand-in for h = relu(GatedGraphConv(graph, atomic, edge_type)).
    node_h = jax.nn.relu(jax.random.normal(k_h, (num_nodes, hidden_dim), jnp.float32))
    last_action_node = jax.random.normal(k_a, (num_graphs, 1), jnp.float32)
    last_node = jax.random.normal(k_n, (num_graphs, in_dim), jnp.float32)

    cat_dim = hidden_dim + 1 + in_dim        # 41, Linear_3's in_dim in CriticSqueeze
    params = init_params(k_p, cat_dim, hidden_dim, 1)
    prepared = prepare_params(params, nodes_per_graph=nodes_per_graph)

    out = critic_squeeze_head(node_h, last_action_node, last_node, prepared,
                              nodes_per_graph=nodes_per_graph)
    out = jax.block_until_ready(out)

    # Pure-JAX reference (same math as the PyTorch module's forward).
    hg_ref = node_h.reshape(num_graphs, nodes_per_graph, hidden_dim).mean(axis=1)
    cat_ref = jnp.concatenate([hg_ref, last_action_node, last_node], axis=1)
    ref = _linear3_ref(cat_ref, *params)     # [num_graphs, 1]

    assert out.shape == (num_graphs, 1), out.shape
    max_err = float(jnp.abs(out - ref).max())
    assert jnp.allclose(out, ref, atol=1e-4, rtol=1e-4), max_err

    print("KERNEL_OK")
</pallas_src>

<mosaic_0001>
module attributes {stable_mosaic.version = 11 : i64} {
  func.func @_critic_head_kernel(%arg0: i32, %arg1: memref<256x128xf32, #tpu.memory_space<vmem>>, %arg2: memref<256x1xf32, #tpu.memory_space<vmem>>, %arg3: memref<256x8xf32, #tpu.memory_space<vmem>>, %arg4: memref<128x32xf32, #tpu.memory_space<vmem>>, %arg5: memref<1x32xf32, #tpu.memory_space<vmem>>, %arg6: memref<8x32xf32, #tpu.memory_space<vmem>>, %arg7: memref<1x32xf32, #tpu.memory_space<vmem>>, %arg8: memref<32x32xf32, #tpu.memory_space<vmem>>, %arg9: memref<1x32xf32, #tpu.memory_space<vmem>>, %arg10: memref<1x32xf32, #tpu.memory_space<vmem>>, %arg11: memref<1x1xf32, #tpu.memory_space<vmem>>, %arg12: memref<256x1xf32, #tpu.memory_space<vmem>>) attributes {dimension_semantics = [#tpu.dimension_semantics<parallel>], iteration_bounds = array<i64: 1>, scalar_prefetch = 0 : i64, scratch_operands = 0 : i64, tpu.core_type = #tpu.core_type<tc>, window_params = [{transform_indices = @transform_0, window_bounds = array<i64: 256, 128>}, {transform_indices = @transform_1, window_bounds = array<i64: 256, 1>}, {transform_indices = @transform_2, window_bounds = array<i64: 256, 8>}, {pipeline_mode = #tpu.pipeline_mode<synchronous>, transform_indices = @transform_3, window_bounds = array<i64: 128, 32>}, {pipeline_mode = #tpu.pipeline_mode<synchronous>, transform_indices = @transform_4, window_bounds = array<i64: 1, 32>}, {pipeline_mode = #tpu.pipeline_mode<synchronous>, transform_indices = @transform_5, window_bounds = array<i64: 8, 32>}, {pipeline_mode = #tpu.pipeline_mode<synchronous>, transform_indices = @transform_6, window_bounds = array<i64: 1, 32>}, {pipeline_mode = #tpu.pipeline_mode<synchronous>, transform_indices = @transform_7, window_bounds = array<i64: 32, 32>}, {pipeline_mode = #tpu.pipeline_mode<synchronous>, transform_indices = @transform_8, window_bounds = array<i64: 1, 32>}, {pipeline_mode = #tpu.pipeline_mode<synchronous>, transform_indices = @transform_9, window_bounds = array<i64: 1, 32>}, {pipeline_mode = #tpu.pipeline_mode<synchronous>, transform_indices = @transform_10, window_bounds = array<i64: 1, 1>}, {transform_indices = @transform_11, window_bounds = array<i64: 256, 1>}]} {
    %c0 = arith.constant 0 : index
    %c0_0 = arith.constant 0 : index
    %0 = vector.load %arg1[%c0, %c0_0] : memref<256x128xf32, #tpu.memory_space<vmem>>, vector<256x128xf32>
    %c0_1 = arith.constant 0 : index
    %c0_2 = arith.constant 0 : index
    %1 = vector.load %arg4[%c0_1, %c0_2] : memref<128x32xf32, #tpu.memory_space<vmem>>, vector<128x32xf32>
    %cst = arith.constant dense<0.000000e+00> : vector<256x32xf32>
    %2 = tpu.matmul %0, %1, %cst {dimension_numbers = #tpu.dot_dimension_numbers<[1], [0], [0], [1], [0, 0, 1, 1], [], []>} : vector<256x128xf32>, vector<128x32xf32>, vector<256x32xf32> -> vector<256x32xf32>
    %c0_3 = arith.constant 0 : index
    %c0_4 = arith.constant 0 : index
    %3 = vector.load %arg2[%c0_3, %c0_4] : memref<256x1xf32, #tpu.memory_space<vmem>>, vector<256x1xf32>
    %c0_5 = arith.constant 0 : index
    %c0_6 = arith.constant 0 : index
    %4 = vector.load %arg5[%c0_5, %c0_6] : memref<1x32xf32, #tpu.memory_space<vmem>>, vector<1x32xf32>
    %5 = vector.broadcast %3 : vector<256x1xf32> to vector<256x32xf32>
    %6 = vector.broadcast %4 : vector<1x32xf32> to vector<256x32xf32>
    %7 = arith.mulf %5, %6 : vector<256x32xf32>
    %8 = arith.addf %2, %7 : vector<256x32xf32>
    %c0_7 = arith.constant 0 : index
    %c0_8 = arith.constant 0 : index
    %9 = vector.load %arg3[%c0_7, %c0_8] : memref<256x8xf32, #tpu.memory_space<vmem>>, vector<256x8xf32>
    %c0_9 = arith.constant 0 : index
    %c0_10 = arith.constant 0 : index
    %10 = vector.load %arg6[%c0_9, %c0_10] : memref<8x32xf32, #tpu.memory_space<vmem>>, vector<8x32xf32>
    %cst_11 = arith.constant dense<0.000000e+00> : vector<256x32xf32>
    %11 = tpu.matmul %9, %10, %cst_11 {dimension_numbers = #tpu.dot_dimension_numbers<[1], [0], [0], [1], [0, 0, 1, 1], [], []>} : vector<256x8xf32>, vector<8x32xf32>, vector<256x32xf32> -> vector<256x32xf32>
    %12 = arith.addf %8, %11 : vector<256x32xf32>
    %c0_12 = arith.constant 0 : index
    %c0_13 = arith.constant 0 : index
    %13 = vector.load %arg7[%c0_12, %c0_13] : memref<1x32xf32, #tpu.memory_space<vmem>>, vector<1x32xf32>
    %14 = vector.broadcast %13 : vector<1x32xf32> to vector<256x32xf32>
    %15 = arith.addf %12, %14 : vector<256x32xf32>
    %16 = math.tanh %15 : vector<256x32xf32>
    %c0_14 = arith.constant 0 : index
    %c0_15 = arith.constant 0 : index
    %17 = vector.load %arg8[%c0_14, %c0_15] : memref<32x32xf32, #tpu.memory_space<vmem>>, vector<32x32xf32>
    %cst_16 = arith.constant dense<0.000000e+00> : vector<256x32xf32>
    %18 = tpu.matmul %16, %17, %cst_16 {dimension_numbers = #tpu.dot_dimension_numbers<[1], [0], [0], [1], [0, 0, 1, 1], [], []>} : vector<256x32xf32>, vector<32x32xf32>, vector<256x32xf32> -> vector<256x32xf32>
    %c0_17 = arith.constant 0 : index
    %c0_18 = arith.constant 0 : index
    %19 = vector.load %arg9[%c0_17, %c0_18] : memref<1x32xf32, #tpu.memory_space<vmem>>, vector<1x32xf32>
    %20 = vector.broadcast %19 : vector<1x32xf32> to vector<256x32xf32>
    %21 = arith.addf %18, %20 : vector<256x32xf32>
    %22 = math.tanh %21 : vector<256x32xf32>
    %c0_19 = arith.constant 0 : index
    %c0_20 = arith.constant 0 : index
    %23 = vector.load %arg10[%c0_19, %c0_20] : memref<1x32xf32, #tpu.memory_space<vmem>>, vector<1x32xf32>
    %24 = vector.broadcast %23 : vector<1x32xf32> to vector<256x32xf32>
    %25 = arith.mulf %22, %24 : vector<256x32xf32>
    %cst_21 = arith.constant dense<0.000000e+00> : vector<256xf32>
    %26 = vector.multi_reduction <add>, %25, %cst_21 [1] : vector<256x32xf32> to vector<256xf32>
    %27 = vector.shape_cast %26 : vector<256xf32> to vector<256x1xf32>
    %c0_22 = arith.constant 0 : index
    %c0_23 = arith.constant 0 : index
    %28 = vector.load %arg11[%c0_22, %c0_23] : memref<1x1xf32, #tpu.memory_space<vmem>>, vector<1x1xf32>
    %29 = vector.broadcast %28 : vector<1x1xf32> to vector<256x1xf32>
    %30 = arith.addf %27, %29 : vector<256x1xf32>
    %c0_24 = arith.constant 0 : index
    %c0_25 = arith.constant 0 : index
    %31 = vector.load %arg12[%c0_24, %c0_25] : memref<256x1xf32, #tpu.memory_space<vmem>>, vector<256x1xf32>
    tpu.vector_store %arg12[%c0_24, %c0_25], %30 {strides = array<i32>} : memref<256x1xf32, #tpu.memory_space<vmem>>, vector<256x1xf32>,
    return
  }
  func.func @transform_0(%arg0: i32) -> (i32, i32) {
    %c0_i32 = arith.constant 0 : i32
    %c0_i32_0 = arith.constant 0 : i32
    return %arg0, %c0_i32 : i32, i32
  }
  func.func @transform_1(%arg0: i32) -> (i32, i32) {
    %c0_i32 = arith.constant 0 : i32
    %c0_i32_0 = arith.constant 0 : i32
    return %arg0, %c0_i32 : i32, i32
  }
  func.func @transform_2(%arg0: i32) -> (i32, i32) {
    %c0_i32 = arith.constant 0 : i32
    %c0_i32_0 = arith.constant 0 : i32
    return %arg0, %c0_i32 : i32, i32
  }
  func.func @transform_3(%arg0: i32) -> (i32, i32) {
    %c0_i32 = arith.constant 0 : i32
    %c0_i32_0 = arith.constant 0 : i32
    %c0_i32_1 = arith.constant 0 : i32
    return %c0_i32, %c0_i32_0 : i32, i32
  }
  func.func @transform_4(%arg0: i32) -> (i32, i32) {
    %c0_i32 = arith.constant 0 : i32
    %c0_i32_0 = arith.constant 0 : i32
    %c0_i32_1 = arith.constant 0 : i32
    return %c0_i32, %c0_i32_0 : i32, i32
  }
  func.func @transform_5(%arg0: i32) -> (i32, i32) {
    %c0_i32 = arith.constant 0 : i32
    %c0_i32_0 = arith.constant 0 : i32
    %c0_i32_1 = arith.constant 0 : i32
    return %c0_i32, %c0_i32_0 : i32, i32
  }
  func.func @transform_6(%arg0: i32) -> (i32, i32) {
    %c0_i32 = arith.constant 0 : i32
    %c0_i32_0 = arith.constant 0 : i32
    %c0_i32_1 = arith.constant 0 : i32
    return %c0_i32, %c0_i32_0 : i32, i32
  }
  func.func @transform_7(%arg0: i32) -> (i32, i32) {
    %c0_i32 = arith.constant 0 : i32
    %c0_i32_0 = arith.constant 0 : i32
    %c0_i32_1 = arith.constant 0 : i32
    return %c0_i32, %c0_i32_0 : i32, i32
  }
  func.func @transform_8(%arg0: i32) -> (i32, i32) {
    %c0_i32 = arith.constant 0 : i32
    %c0_i32_0 = arith.constant 0 : i32
    %c0_i32_1 = arith.constant 0 : i32
    return %c0_i32, %c0_i32_0 : i32, i32
  }
  func.func @transform_9(%arg0: i32) -> (i32, i32) {
    %c0_i32 = arith.constant 0 : i32
    %c0_i32_0 = arith.constant 0 : i32
    %c0_i32_1 = arith.constant 0 : i32
    return %c0_i32, %c0_i32_0 : i32, i32
  }
  func.func @transform_10(%arg0: i32) -> (i32, i32) {
    %c0_i32 = arith.constant 0 : i32
    %c0_i32_0 = arith.constant 0 : i32
    %c0_i32_1 = arith.constant 0 : i32
    return %c0_i32, %c0_i32_0 : i32, i32
  }
  func.func @transform_11(%arg0: i32) -> (i32, i32) {
    %c0_i32 = arith.constant 0 : i32
    %c0_i32_0 = arith.constant 0 : i32
    return %arg0, %c0_i32 : i32, i32
  }
}

</mosaic_0001>

<llo_original>
// kernel: critic_squeeze_head.1
$region0: #{critic_squeeze_head.1}
  #allocation0 [shape = 'u32[]', space=smem, size = 0x4, offset = 0x4, fixed_abs, tag = 'smem constant byte address 0x4 - core index']
  #allocation1 [shape = 'u32[144,128]{1,0:T(1,128)}', space=vmem, size = 0x12000, scoped, tag = 'internal scratch']
  #allocation2 [shape = 'f32[1,1]{1,0:T(1,128)S(1)}', space=vmem, size = 0x200, scoped, tag = 'scoped memory for critic_squeeze_head.1']
  %s0 = inlined_call_operand.vmem [shape: f32[256,128], index: 0, kind: input, shape index: {}]
  %s1 = inlined_call_operand.vmem [shape: f32[256,1], index: 1, kind: input, shape index: {}]
  %s2 = inlined_call_operand.vmem [shape: f32[256,8], index: 2, kind: input, shape index: {}]
  %s3 = inlined_call_operand.vmem [shape: f32[128,32], index: 3, kind: input, shape index: {}]
  %s4 = inlined_call_operand.vmem [shape: f32[1,32], index: 4, kind: input, shape index: {}]
  %s5 = inlined_call_operand.vmem [shape: f32[8,32], index: 5, kind: input, shape index: {}]
  %s6 = inlined_call_operand.vmem [shape: f32[1,32], index: 6, kind: input, shape index: {}]
  %s7 = inlined_call_operand.vmem [shape: f32[32,32], index: 7, kind: input, shape index: {}]
  %s8 = inlined_call_operand.vmem [shape: f32[1,32], index: 8, kind: input, shape index: {}]
  %s9 = inlined_call_operand.vmem [shape: f32[1,32], index: 9, kind: input, shape index: {}]
  %s10 = inlined_call_operand.<no memory space> [shape: f32[1,1], index: 10, kind: input, shape index: {}]
  %s11 = inlined_call_operand.vmem [shape: f32[256,1], index: 11, kind: output, shape index: {}]
  %s12 = sld [smem:[#allocation0]]
  $region54: #{critic_squeeze_head.1} parent=0
    _
  %s14 = ssub.s32 1, %s12
  %s15 = scalar_select 0, %s14, %s12
  %v16 = vstv %s10
  %17 = vst [vmem:[#allocation2] sm:$0x1] %v16
  // Predicated region
  $region2: #{critic_squeeze_head.1} parent=0 // pred_check
    _
  $region3: #{critic_squeeze_head.1} parent=0 // pred_check_branch
    %19 = sbr.rel (0) target = $region5
  $region4: #{critic_squeeze_head.1} parent=0 // pred_region
    _
  $region5: #{critic_squeeze_head.1} parent=0 // pred_fallthru
    _
  // Predicated region
  $region6: #{critic_squeeze_head.1} parent=0 // pred_check
    _
  $region7: #{critic_squeeze_head.1} parent=0 // pred_check_branch
    %21 = sbr.rel (0) target = $region9
  $region8: #{critic_squeeze_head.1} parent=0 // pred_region
    _
  $region9: #{critic_squeeze_head.1} parent=0 // pred_fallthru
    _
  // Predicated region
  $region10: #{critic_squeeze_head.1} parent=0 // pred_check
    _
  $region11: #{critic_squeeze_head.1} parent=0 // pred_check_branch
    %23 = sbr.rel (0) target = $region13
  $region12: #{critic_squeeze_head.1} parent=0 // pred_region
    _
  $region13: #{critic_squeeze_head.1} parent=0 // pred_fallthru
    _
  // Predicated region
  $region14: #{critic_squeeze_head.1} parent=0 // pred_check
    _
  $region15: #{critic_squeeze_head.1} parent=0 // pred_check_branch
    %25 = sbr.rel (0) target = $region17
  $region16: #{critic_squeeze_head.1} parent=0 // pred_region
    _
  $region17: #{critic_squeeze_head.1} parent=0 // pred_fallthru
    _
  // Predicated region
  $region18: #{critic_squeeze_head.1} parent=0 // pred_check
    _
  $region19: #{critic_squeeze_head.1} parent=0 // pred_check_branch
    %27 = sbr.rel (0) target = $region21
  $region20: #{critic_squeeze_head.1} parent=0 // pred_region
    _
  $region21: #{critic_squeeze_head.1} parent=0 // pred_fallthru
    _
  // Predicated region
  $region22: #{critic_squeeze_head.1} parent=0 // pred_check
    _
  $region23: #{critic_squeeze_head.1} parent=0 // pred_check_branch
    %29 = sbr.rel (0) target = $region25
  $region24: #{critic_squeeze_head.1} parent=0 // pred_region
    _
  $region25: #{critic_squeeze_head.1} parent=0 // pred_fallthru
    _
  // Predicated region
  $region26: #{critic_squeeze_head.1} parent=0 // pred_check
    _
  $region27: #{critic_squeeze_head.1} parent=0 // pred_check_branch
    %31 = sbr.rel (0) target = $region29
  $region28: #{critic_squeeze_head.1} parent=0 // pred_region
    _
  $region29: #{critic_squeeze_head.1} parent=0 // pred_fallthru
    _
  // Predicated region
  $region30: #{critic_squeeze_head.1} parent=0 // pred_check
    _
  $region31: #{critic_squeeze_head.1} parent=0 // pred_check_branch
    %33 = sbr.rel (0) target = $region33
  $region32: #{critic_squeeze_head.1} parent=0 // pred_region
    _
  $region33: #{critic_squeeze_head.1} parent=0 // pred_fallthru
    _
  // Predicated region
  $region34: #{critic_squeeze_head.1} parent=0 // pred_check
    _
  $region35: #{critic_squeeze_head.1} parent=0 // pred_check_branch
    %35 = sbr.rel (0) target = $region37
  $region36: #{critic_squeeze_head.1} parent=0 // pred_region
    _
  $region37: #{critic_squeeze_head.1} parent=0 // pred_fallthru
    _
  // Predicated region
  $region38: #{critic_squeeze_head.1} parent=0 // pred_check
    _
  $region39: #{critic_squeeze_head.1} parent=0 // pred_check_branch
    %37 = sbr.rel (0) target = $region41
  $region40: #{critic_squeeze_head.1} parent=0 // pred_region
    _
  $region41: #{critic_squeeze_head.1} parent=0 // pred_fallthru
    _
  // Predicated region
  $region42: #{critic_squeeze_head.1} parent=0 // pred_check
    _
  $region43: #{critic_squeeze_head.1} parent=0 // pred_check_branch
    %39 = sbr.rel (0) target = $region45
  $region44: #{critic_squeeze_head.1} parent=0 // pred_region
    _
  $region45: #{critic_squeeze_head.1} parent=0 // pred_fallthru
    _
  %v40 = vld [vmem:[%s0] sm:$0xff]
  %v41 = vld [vmem:[%s0 + $0x8] sm:$0xff]
  %v42 = vld [vmem:[%s0 + $0x10] sm:$0xff]
  %v43 = vld [vmem:[%s0 + $0x18] sm:$0xff]
  %v44 = vld [vmem:[%s0 + $0x20] sm:$0xff]
  %v45 = vld [vmem:[%s0 + $0x28] sm:$0xff]
  %v46 = vld [vmem:[%s0 + $0x30] sm:$0xff]
  %v47 = vld [vmem:[%s0 + $0x38] sm:$0xff]
  %v48 = vld [vmem:[%s0 + $0x40] sm:$0xff]
  %v49 = vld [vmem:[%s0 + $0x48] sm:$0xff]
  %v50 = vld [vmem:[%s0 + $0x50] sm:$0xff]
  %v51 = vld [vmem:[%s0 + $0x58] sm:$0xff]
  %v52 = vld [vmem:[%s0 + $0x60] sm:$0xff]
  %v53 = vld [vmem:[%s0 + $0x68] sm:$0xff]
  %v54 = vld [vmem:[%s0 + $0x70] sm:$0xff]
  %v55 = vld [vmem:[%s0 + $0x78] sm:$0xff]
  %v56 = vld [vmem:[%s0 + $0x80] sm:$0xff]
  %v57 = vld [vmem:[%s0 + $0x88] sm:$0xff]
  %v58 = vld [vmem:[%s0 + $0x90] sm:$0xff]
  %v59 = vld [vmem:[%s0 + $0x98] sm:$0xff]
  %v60 = vld [vmem:[%s0 + $0xa0] sm:$0xff]
  %v61 = vld [vmem:[%s0 + $0xa8] sm:$0xff]
  %v62 = vld [vmem:[%s0 + $0xb0] sm:$0xff]
  %v63 = vld [vmem:[%s0 + $0xb8] sm:$0xff]
  %v64 = vld [vmem:[%s0 + $0xc0] sm:$0xff]
  %v65 = vld [vmem:[%s0 + $0xc8] sm:$0xff]
  %v66 = vld [vmem:[%s0 + $0xd0] sm:$0xff]
  %v67 = vld [vmem:[%s0 + $0xd8] sm:$0xff]
  %v68 = vld [vmem:[%s0 + $0xe0] sm:$0xff]
  %v69 = vld [vmem:[%s0 + $0xe8] sm:$0xff]
  %v70 = vld [vmem:[%s0 + $0xf0] sm:$0xff]
  %v71 = vld [vmem:[%s0 + $0xf8] sm:$0xff]
  %v72 = vld [vmem:[%s3] sm:$0xff]
  %v73 = vld [vmem:[%s3 + $0x8] sm:$0xff]
  %v74 = vld [vmem:[%s3 + $0x10] sm:$0xff]
  %v75 = vld [vmem:[%s3 + $0x18] sm:$0xff]
  %v76 = vld [vmem:[%s3 + $0x20] sm:$0xff]
  %v77 = vld [vmem:[%s3 + $0x28] sm:$0xff]
  %v78 = vld [vmem:[%s3 + $0x30] sm:$0xff]
  %v79 = vld [vmem:[%s3 + $0x38] sm:$0xff]
  %v80 = vld [vmem:[%s3 + $0x40] sm:$0xff]
  %v81 = vld [vmem:[%s3 + $0x48] sm:$0xff]
  %v82 = vld [vmem:[%s3 + $0x50] sm:$0xff]
  %v83 = vld [vmem:[%s3 + $0x58] sm:$0xff]
  %v84 = vld [vmem:[%s3 + $0x60] sm:$0xff]
  %v85 = vld [vmem:[%s3 + $0x68] sm:$0xff]
  %v86 = vld [vmem:[%s3 + $0x70] sm:$0xff]
  %v87 = vld [vmem:[%s3 + $0x78] sm:$0xff]
  %v88 = vld [vmem:[%s1] sm:$0xff]
  %v89 = vld [vmem:[%s1 + $0x8] sm:$0xff]
  %v90 = vld [vmem:[%s1 + $0x10] sm:$0xff]
  %v91 = vld [vmem:[%s1 + $0x18] sm:$0xff]
  %v92 = vld [vmem:[%s1 + $0x20] sm:$0xff]
  %v93 = vld [vmem:[%s1 + $0x28] sm:$0xff]
  %v94 = vld [vmem:[%s1 + $0x30] sm:$0xff]
  %v95 = vld [vmem:[%s1 + $0x38] sm:$0xff]
  %v96 = vld [vmem:[%s1 + $0x40] sm:$0xff]
  %v97 = vld [vmem:[%s1 + $0x48] sm:$0xff]
  %v98 = vld [vmem:[%s1 + $0x50] sm:$0xff]
  %v99 = vld [vmem:[%s1 + $0x58] sm:$0xff]
  %v100 = vld [vmem:[%s1 + $0x60] sm:$0xff]
  %v101 = vld [vmem:[%s1 + $0x68] sm:$0xff]
  %v102 = vld [vmem:[%s1 + $0x70] sm:$0xff]
  %v103 = vld [vmem:[%s1 + $0x78] sm:$0xff]
  %v104 = vld [vmem:[%s1 + $0x80] sm:$0xff]
  %v105 = vld [vmem:[%s1 + $0x88] sm:$0xff]
  %v106 = vld [vmem:[%s1 + $0x90] sm:$0xff]
  %v107 = vld [vmem:[%s1 + $0x98] sm:$0xff]
  %v108 = vld [vmem:[%s1 + $0xa0] sm:$0xff]
  %v109 = vld [vmem:[%s1 + $0xa8] sm:$0xff]
  %v110 = vld [vmem:[%s1 + $0xb0] sm:$0xff]
  %v111 = vld [vmem:[%s1 + $0xb8] sm:$0xff]
  %v112 = vld [vmem:[%s1 + $0xc0] sm:$0xff]
  %v113 = vld [vmem:[%s1 + $0xc8] sm:$0xff]
  %v114 = vld [vmem:[%s1 + $0xd0] sm:$0xff]
  %v115 = vld [vmem:[%s1 + $0xd8] sm:$0xff]
  %v116 = vld [vmem:[%s1 + $0xe0] sm:$0xff]
  %v117 = vld [vmem:[%s1 + $0xe8] sm:$0xff]
  %v118 = vld [vmem:[%s1 + $0xf0] sm:$0xff]
  %v119 = vld [vmem:[%s1 + $0xf8] sm:$0xff]
  %v120 = vld [vmem:[%s4] sm:$0x1]
  %122 = vset.pattern.permute.xlu0 0
  %123 = vperm.xlu0 %122, %v88
  %v124 = vpop.permute.xlu0 %123
  %127 = vset.pattern.permute.xlu0 0
  %128 = vperm.xlu0 %127, %v89
  %v129 = vpop.permute.xlu0 %128
  %132 = vset.pattern.permute.xlu0 0
  %133 = vperm.xlu0 %132, %v90
  %v134 = vpop.permute.xlu0 %133
  %137 = vset.pattern.permute.xlu0 0
  %138 = vperm.xlu0 %137, %v91
  %v139 = vpop.permute.xlu0 %138
  %142 = vset.pattern.permute.xlu0 0
  %143 = vperm.xlu0 %142, %v92
  %v144 = vpop.permute.xlu0 %143
  %147 = vset.pattern.permute.xlu0 0
  %148 = vperm.xlu0 %147, %v93
  %v149 = vpop.permute.xlu0 %148
  %152 = vset.pattern.permute.xlu0 0
  %153 = vperm.xlu0 %152, %v94
  %v154 = vpop.permute.xlu0 %153
  %157 = vset.pattern.permute.xlu0 0
  %158 = vperm.xlu0 %157, %v95
  %v159 = vpop.permute.xlu0 %158
  %162 = vset.pattern.permute.xlu0 0
  %163 = vperm.xlu0 %162, %v96
  %v164 = vpop.permute.xlu0 %163
  %167 = vset.pattern.permute.xlu0 0
  %168 = vperm.xlu0 %167, %v97
  %v169 = vpop.permute.xlu0 %168
  %172 = vset.pattern.permute.xlu0 0
  %173 = vperm.xlu0 %172, %v98
  %v174 = vpop.permute.xlu0 %173
  %177 = vset.pattern.permute.xlu0 0
  %178 = vperm.xlu0 %177, %v99
  %v179 = vpop.permute.xlu0 %178
  %182 = vset.pattern.permute.xlu0 0
  %183 = vperm.xlu0 %182, %v100
  %v184 = vpop.permute.xlu0 %183
  %187 = vset.pattern.permute.xlu0 0
  %188 = vperm.xlu0 %187, %v101
  %v189 = vpop.permute.xlu0 %188
  %192 = vset.pattern.permute.xlu0 0
  %193 = vperm.xlu0 %192, %v102
  %v194 = vpop.permute.xlu0 %193
  %197 = vset.pattern.permute.xlu0 0
  %198 = vperm.xlu0 %197, %v103
  %v199 = vpop.permute.xlu0 %198
  %202 = vset.pattern.permute.xlu0 0
  %203 = vperm.xlu0 %202, %v104
  %v204 = vpop.permute.xlu0 %203
  %207 = vset.pattern.permute.xlu0 0
  %208 = vperm.xlu0 %207, %v105
  %v209 = vpop.permute.xlu0 %208
  %212 = vset.pattern.permute.xlu0 0
  %213 = vperm.xlu0 %212, %v106
  %v214 = vpop.permute.xlu0 %213
  %217 = vset.pattern.permute.xlu0 0
  %218 = vperm.xlu0 %217, %v107
  %v219 = vpop.permute.xlu0 %218
  %222 = vset.pattern.permute.xlu0 0
  %223 = vperm.xlu0 %222, %v108
  %v224 = vpop.permute.xlu0 %223
  %227 = vset.pattern.permute.xlu0 0
  %228 = vperm.xlu0 %227, %v109
  %v229 = vpop.permute.xlu0 %228
  %232 = vset.pattern.permute.xlu0 0
  %233 = vperm.xlu0 %232, %v110
  %v234 = vpop.permute.xlu0 %233
  %237 = vset.pattern.permute.xlu0 0
  %238 = vperm.xlu0 %237, %v111
  %v239 = vpop.permute.xlu0 %238
  %242 = vset.pattern.permute.xlu0 0
  %243 = vperm.xlu0 %242, %v112
  %v244 = vpop.permute.xlu0 %243
  %247 = vset.pattern.permute.xlu0 0
  %248 = vperm.xlu0 %247, %v113
  %v249 = vpop.permute.xlu0 %248
  %252 = vset.pattern.permute.xlu0 0
  %253 = vperm.xlu0 %252, %v114
  %v254 = vpop.permute.xlu0 %253
  %257 = vset.pattern.permute.xlu0 0
  %258 = vperm.xlu0 %257, %v115
  %v259 = vpop.permute.xlu0 %258
  %262 = vset.pattern.permute.xlu0 0
  %263 = vperm.xlu0 %262, %v116
  %v264 = vpop.permute.xlu0 %263
  %267 = vset.pattern.permute.xlu0 0
  %268 = vperm.xlu0 %267, %v117
  %v269 = vpop.permute.xlu0 %268
  %272 = vset.pattern.permute.xlu0 0
  %273 = vperm.xlu0 %272, %v118
  %v274 = vpop.permute.xlu0 %273
  %277 = vset.pattern.permute.xlu0 0
  %278 = vperm.xlu0 %277, %v119
  %v279 = vpop.permute.xlu0 %278
  %v282 = vlaneseq
  %v283 = vshrl.u32 %v282, 7
  %v284 = vsub.s32 0, %v283
  %v285 = vrot.slane %v120, %v284
  %v287 = vmul.f32 %v124, %v285
  %v288 = vmul.f32 %v129, %v285
  %v289 = vmul.f32 %v134, %v285
  %v290 = vmul.f32 %v139, %v285
  %v291 = vmul.f32 %v144, %v285
  %v292 = vmul.f32 %v149, %v285
  %v293 = vmul.f32 %v154, %v285
  %v294 = vmul.f32 %v159, %v285
  %v295 = vmul.f32 %v164, %v285
  %v296 = vmul.f32 %v169, %v285
  %v297 = vmul.f32 %v174, %v285
  %v298 = vmul.f32 %v179, %v285
  %v299 = vmul.f32 %v184, %v285
  %v300 = vmul.f32 %v189, %v285
  %v301 = vmul.f32 %v194, %v285
  %v302 = vmul.f32 %v199, %v285
  %v303 = vmul.f32 %v204, %v285
  %v304 = vmul.f32 %v209, %v285
  %v305 = vmul.f32 %v214, %v285
  %v306 = vmul.f32 %v219, %v285
  %v307 = vmul.f32 %v224, %v285
  %v308 = vmul.f32 %v229, %v285
  %v309 = vmul.f32 %v234, %v285
  %v310 = vmul.f32 %v239, %v285
  %v311 = vmul.f32 %v244, %v285
  %v312 = vmul.f32 %v249, %v285
  %v313 = vmul.f32 %v254, %v285
  %v314 = vmul.f32 %v259, %v285
  %v315 = vmul.f32 %v264, %v285
  %v316 = vmul.f32 %v269, %v285
  %v317 = vmul.f32 %v274, %v285
  %v318 = vmul.f32 %v279, %v285
  %319 = vmatprep.subr.mxu0 0.0
  %320 = vmatpush1.msra.mxu0 %v87
  %321 = vmatprep.subr.mxu0 0.0
  %322 = vmatpush1.msra.mxu0 %v86
  %323 = vmatprep.subr.mxu0 0.0
  %324 = vmatpush1.msra.mxu0 %v85
  %325 = vmatprep.subr.mxu0 0.0
  %326 = vmatpush1.msra.mxu0 %v84
  %327 = vmatprep.subr.mxu0 0.0
  %328 = vmatpush1.msra.mxu0 %v83
  %329 = vmatprep.subr.mxu0 0.0
  %330 = vmatpush1.msra.mxu0 %v82
  %331 = vmatprep.subr.mxu0 0.0
  %332 = vmatpush1.msra.mxu0 %v81
  %333 = vmatprep.subr.mxu0 0.0
  %334 = vmatpush1.msra.mxu0 %v80
  %335 = vmatprep.subr.mxu0 0.0
  %336 = vmatpush1.msra.mxu0 %v79
  %337 = vmatprep.subr.mxu0 0.0
  %338 = vmatpush1.msra.mxu0 %v78
  %339 = vmatprep.subr.mxu0 0.0
  %340 = vmatpush1.msra.mxu0 %v77
  %341 = vmatprep.subr.mxu0 0.0
  %342 = vmatpush1.msra.mxu0 %v76
  %343 = vmatprep.subr.mxu0 0.0
  %344 = vmatpush1.msra.mxu0 %v75
  %345 = vmatprep.subr.mxu0 0.0
  %346 = vmatpush1.msra.mxu0 %v74
  %347 = vmatprep.subr.mxu0 0.0
  %348 = vmatpush1.msra.mxu0 %v73
  %349 = vmatprep.subr.mxu0 0.0
  %350 = vmatpush1.msra.mxu0 %v72
  %351 = vmatprep.subr.mxu0 0.0
  %352 = vmatpush2.msra.mxu0 0.0
  %353 = vmatprep.subr.mxu0 0.0
  %354 = vmatpush2.msra.mxu0 0.0
  %355 = vmatprep.subr.mxu0 0.0
  %356 = vmatpush2.msra.mxu0 0.0
  %357 = vmatprep.subr.mxu0 0.0
  %358 = vmatpush2.msra.mxu0 0.0
  %359 = vmatprep.subr.mxu0 0.0
  %360 = vmatpush2.msra.mxu0 0.0
  %361 = vmatprep.subr.mxu0 0.0
  %362 = vmatpush2.msra.mxu0 0.0
  %363 = vmatprep.subr.mxu0 0.0
  %364 = vmatpush2.msra.mxu0 0.0
  %365 = vmatprep.subr.mxu0 0.0
  %366 = vmatpush2.msra.mxu0 0.0
  %367 = vmatprep.subr.mxu0 0.0
  %368 = vmatpush2.msra.mxu0 0.0
  %369 = vmatprep.subr.mxu0 0.0
  %370 = vmatpush2.msra.mxu0 0.0
  %371 = vmatprep.subr.mxu0 0.0
  %372 = vmatpush2.msra.mxu0 0.0
  %373 = vmatprep.subr.mxu0 0.0
  %374 = vmatpush2.msra.mxu0 0.0
  %375 = vmatprep.subr.mxu0 0.0
  %376 = vmatpush2.msra.mxu0 0.0
  %377 = vmatprep.subr.mxu0 0.0
  %378 = vmatpush2.msra.mxu0 0.0
  %379 = vmatprep.subr.mxu0 0.0
  %380 = vmatpush2.msra.mxu0 0.0
  %381 = vmatprep.subr.mxu0 0.0
  %382 = vmatpush2.msra.mxu0 0.0
  %383 = vmatprep.mubr.f32.mxu0 0.0
  %384 = vmatmul.mubr.f32.gmra.mxu0 %v40
  %v385 = vpop.f32.mrf.mxu0
  %v386 = vadd.f32 %v287, %v385
  %v387 = vpop.f32.mrf.mxu0
  %388 = vmatprep.mubr.f32.mxu0 0.0
  %389 = vmatmul.mubr.f32.gmra.mxu0 %v41
  %v390 = vpop.f32.mrf.mxu0
  %v391 = vadd.f32 %v288, %v390
  %v392 = vpop.f32.mrf.mxu0
  %393 = vmatprep.mubr.f32.mxu0 0.0
  %394 = vmatmul.mubr.f32.gmra.mxu0 %v42
  %v395 = vpop.f32.mrf.mxu0
  %v396 = vadd.f32 %v289, %v395
  %v397 = vpop.f32.mrf.mxu0
  %398 = vmatprep.mubr.f32.mxu0 0.0
  %399 = vmatmul.mubr.f32.gmra.mxu0 %v43
  %v400 = vpop.f32.mrf.mxu0
  %v401 = vadd.f32 %v290, %v400
  %v402 = vpop.f32.mrf.mxu0
  %403 = vmatprep.mubr.f32.mxu0 0.0
  %404 = vmatmul.mubr.f32.gmra.mxu0 %v44
  %v405 = vpop.f32.mrf.mxu0
  %v406 = vadd.f32 %v291, %v405
  %v407 = vpop.f32.mrf.mxu0
  %408 = vmatprep.mubr.f32.mxu0 0.0
  %409 = vmatmul.mubr.f32.gmra.mxu0 %v45
  %v410 = vpop.f32.mrf.mxu0
  %v411 = vadd.f32 %v292, %v410
  %v412 = vpop.f32.mrf.mxu0
  %413 = vmatprep.mubr.f32.mxu0 0.0
  %414 = vmatmul.mubr.f32.gmra.mxu0 %v46
  %v415 = vpop.f32.mrf.mxu0
  %v416 = vadd.f32 %v293, %v415
  %v417 = vpop.f32.mrf.mxu0
  %418 = vmatprep.mubr.f32.mxu0 0.0
  %419 = vmatmul.mubr.f32.gmra.mxu0 %v47
  %v420 = vpop.f32.mrf.mxu0
  %v421 = vadd.f32 %v294, %v420
  %v422 = vpop.f32.mrf.mxu0
  %423 = vmatprep.mubr.f32.mxu0 0.0
  %424 = vmatmul.mubr.f32.gmra.mxu0 %v48
  %v425 = vpop.f32.mrf.mxu0
  %v426 = vadd.f32 %v295, %v425
  %v427 = vpop.f32.mrf.mxu0
  %428 = vmatprep.mubr.f32.mxu0 0.0
  %429 = vmatmul.mubr.f32.gmra.mxu0 %v49
  %v430 = vpop.f32.mrf.mxu0
  %v431 = vadd.f32 %v296, %v430
  %v432 = vpop.f32.mrf.mxu0
  %433 = vmatprep.mubr.f32.mxu0 0.0
  %434 = vmatmul.mubr.f32.gmra.mxu0 %v50
  %v435 = vpop.f32.mrf.mxu0
  %v436 = vadd.f32 %v297, %v435
  %v437 = vpop.f32.mrf.mxu0
  %438 = vmatprep.mubr.f32.mxu0 0.0
  %439 = vmatmul.mubr.f32.gmra.mxu0 %v51
  %v440 = vpop.f32.mrf.mxu0
  %v441 = vadd.f32 %v298, %v440
  %v442 = vpop.f32.mrf.mxu0
  %443 = vmatprep.mubr.f32.mxu0 0.0
  %444 = vmatmul.mubr.f32.gmra.mxu0 %v52
  %v445 = vpop.f32.mrf.mxu0
  %v446 = vadd.f32 %v299, %v445
  %v447 = vpop.f32.mrf.mxu0
  %448 = vmatprep.mubr.f32.mxu0 0.0
  %449 = vmatmul.mubr.f32.gmra.mxu0 %v53
  %v450 = vpop.f32.mrf.mxu0
  %v451 = vadd.f32 %v300, %v450
  %v452 = vpop.f32.mrf.mxu0
  %453 = vmatprep.mubr.f32.mxu0 0.0
  %454 = vmatmul.mubr.f32.gmra.mxu0 %v54
  %v455 = vpop.f32.mrf.mxu0
  %v456 = vadd.f32 %v301, %v455
  %v457 = vpop.f32.mrf.mxu0
  %458 = vmatprep.mubr.f32.mxu0 0.0
  %459 = vmatmul.mubr.f32.gmra.mxu0 %v55
  %v460 = vpop.f32.mrf.mxu0
  %v461 = vadd.f32 %v302, %v460
  %v462 = vpop.f32.mrf.mxu0
  %463 = vmatprep.mubr.f32.mxu0 0.0
  %464 = vmatmul.mubr.f32.gmra.mxu0 %v56
  %v465 = vpop.f32.mrf.mxu0
  %v466 = vadd.f32 %v303, %v465
  %v467 = vpop.f32.mrf.mxu0
  %468 = vmatprep.mubr.f32.mxu0 0.0
  %469 = vmatmul.mubr.f32.gmra.mxu0 %v57
  %v470 = vpop.f32.mrf.mxu0
  %v471 = vadd.f32 %v304, %v470
  %v472 = vpop.f32.mrf.mxu0
  %473 = vmatprep.mubr.f32.mxu0 0.0
  %474 = vmatmul.mubr.f32.gmra.mxu0 %v58
  %v475 = vpop.f32.mrf.mxu0
  %v476 = vadd.f32 %v305, %v475
  %v477 = vpop.f32.mrf.mxu0
  %478 = vmatprep.mubr.f32.mxu0 0.0
  %479 = vmatmul.mubr.f32.gmra.mxu0 %v59
  %v480 = vpop.f32.mrf.mxu0
  %v481 = vadd.f32 %v306, %v480
  %v482 = vpop.f32.mrf.mxu0
  %483 = vmatprep.mubr.f32.mxu0 0.0
  %484 = vmatmul.mubr.f32.gmra.mxu0 %v60
  %v485 = vpop.f32.mrf.mxu0
  %v486 = vadd.f32 %v307, %v485
  %v487 = vpop.f32.mrf.mxu0
  %488 = vmatprep.mubr.f32.mxu0 0.0
  %489 = vmatmul.mubr.f32.gmra.mxu0 %v61
  %v490 = vpop.f32.mrf.mxu0
  %v491 = vadd.f32 %v308, %v490
  %v492 = vpop.f32.mrf.mxu0
  %493 = vmatprep.mubr.f32.mxu0 0.0
  %494 = vmatmul.mubr.f32.gmra.mxu0 %v62
  %v495 = vpop.f32.mrf.mxu0
  %v496 = vadd.f32 %v309, %v495
  %v497 = vpop.f32.mrf.mxu0
  %498 = vmatprep.mubr.f32.mxu0 0.0
  %499 = vmatmul.mubr.f32.gmra.mxu0 %v63
  %v500 = vpop.f32.mrf.mxu0
  %v501 = vadd.f32 %v310, %v500
  %v502 = vpop.f32.mrf.mxu0
  %503 = vmatprep.mubr.f32.mxu0 0.0
  %504 = vmatmul.mubr.f32.gmra.mxu0 %v64
  %v505 = vpop.f32.mrf.mxu0
  %v506 = vadd.f32 %v311, %v505
  %v507 = vpop.f32.mrf.mxu0
  %508 = vmatprep.mubr.f32.mxu0 0.0
  %509 = vmatmul.mubr.f32.gmra.mxu0 %v65
  %v510 = vpop.f32.mrf.mxu0
  %v511 = vadd.f32 %v312, %v510
  %v512 = vpop.f32.mrf.mxu0
  %513 = vmatprep.mubr.f32.mxu0 0.0
  %514 = vmatmul.mubr.f32.gmra.mxu0 %v66
  %v515 = vpop.f32.mrf.mxu0
  %v516 = vadd.f32 %v313, %v515
  %v517 = vpop.f32.mrf.mxu0
  %518 = vmatprep.mubr.f32.mxu0 0.0
  %519 = vmatmul.mubr.f32.gmra.mxu0 %v67
  %v520 = vpop.f32.mrf.mxu0
  %v521 = vadd.f32 %v314, %v520
  %v522 = vpop.f32.mrf.mxu0
  %523 = vmatprep.mubr.f32.mxu0 0.0
  %524 = vmatmul.mubr.f32.gmra.mxu0 %v68
  %v525 = vpop.f32.mrf.mxu0
  %v526 = vadd.f32 %v315, %v525
  %v527 = vpop.f32.mrf.mxu0
  %528 = vmatprep.mubr.f32.mxu0 0.0
  %529 = vmatmul.mubr.f32.gmra.mxu0 %v69
  %v530 = vpop.f32.mrf.mxu0
  %v531 = vadd.f32 %v316, %v530
  %v532 = vpop.f32.mrf.mxu0
  %533 = vmatprep.mubr.f32.mxu0 0.0
  %534 = vmatmul.mubr.f32.gmra.mxu0 %v70
  %v535 = vpop.f32.mrf.mxu0
  %v536 = vadd.f32 %v317, %v535
  %v537 = vpop.f32.mrf.mxu0
  %538 = vmatprep.mubr.f32.mxu0 0.0
  %539 = vmatmul.mubr.f32.gmra.mxu0 %v71
  %v540 = vpop.f32.mrf.mxu0
  %v541 = vadd.f32 %v318, %v540
  %v542 = vpop.f32.mrf.mxu0
  %543 = vdwg.mxu0
  %v544 = vld [vmem:[%s2] sm:$0xff]
  %v545 = vld [vmem:[%s2 + $0x8] sm:$0xff]
  %v546 = vld [vmem:[%s2 + $0x10] sm:$0xff]
  %v547 = vld [vmem:[%s2 + $0x18] sm:$0xff]
  %v548 = vld [vmem:[%s2 + $0x20] sm:$0xff]
  %v549 = vld [vmem:[%s2 + $0x28] sm:$0xff]
  %v550 = vld [vmem:[%s2 + $0x30] sm:$0xff]
  %v551 = vld [vmem:[%s2 + $0x38] sm:$0xff]
  %v552 = vld [vmem:[%s2 + $0x40] sm:$0xff]
  %v553 = vld [vmem:[%s2 + $0x48] sm:$0xff]
  %v554 = vld [vmem:[%s2 + $0x50] sm:$0xff]
  %v555 = vld [vmem:[%s2 + $0x58] sm:$0xff]
  %v556 = vld [vmem:[%s2 + $0x60] sm:$0xff]
  %v557 = vld [vmem:[%s2 + $0x68] sm:$0xff]
  %v558 = vld [vmem:[%s2 + $0x70] sm:$0xff]
  %v559 = vld [vmem:[%s2 + $0x78] sm:$0xff]
  %v560 = vld [vmem:[%s2 + $0x80] sm:$0xff]
  %v561 = vld [vmem:[%s2 + $0x88] sm:$0xff]
  %v562 = vld [vmem:[%s2 + $0x90] sm:$0xff]
  %v563 = vld [vmem:[%s2 + $0x98] sm:$0xff]
  %v564 = vld [vmem:[%s2 + $0xa0] sm:$0xff]
  %v565 = vld [vmem:[%s2 + $0xa8] sm:$0xff]
  %v566 = vld [vmem:[%s2 + $0xb0] sm:$0xff]
  %v567 = vld [vmem:[%s2 + $0xb8] sm:$0xff]
  %v568 = vld [vmem:[%s2 + $0xc0] sm:$0xff]
  %v569 = vld [vmem:[%s2 + $0xc8] sm:$0xff]
  %v570 = vld [vmem:[%s2 + $0xd0] sm:$0xff]
  %v571 = vld [vmem:[%s2 + $0xd8] sm:$0xff]
  %v572 = vld [vmem:[%s2 + $0xe0] sm:$0xff]
  %v573 = vld [vmem:[%s2 + $0xe8] sm:$0xff]
  %v574 = vld [vmem:[%s2 + $0xf0] sm:$0xff]
  %v575 = vld [vmem:[%s2 + $0xf8] sm:$0xff]
  %v576 = vld [vmem:[%s5] sm:$0xff]
  %vm577 = vcmask 64512
  %v579 = vsel %vm577, %v544, 0
  %v582 = vsel %vm577, %v545, 0
  %v585 = vsel %vm577, %v546, 0
  %v588 = vsel %vm577, %v547, 0
  %v591 = vsel %vm577, %v548, 0
  %v594 = vsel %vm577, %v549, 0
  %v597 = vsel %vm577, %v550, 0
  %v600 = vsel %vm577, %v551, 0
  %v603 = vsel %vm577, %v552, 0
  %v606 = vsel %vm577, %v553, 0
  %v609 = vsel %vm577, %v554, 0
  %v612 = vsel %vm577, %v555, 0
  %v615 = vsel %vm577, %v556, 0
  %v618 = vsel %vm577, %v557, 0
  %v621 = vsel %vm577, %v558, 0
  %v624 = vsel %vm577, %v559, 0
  %v627 = vsel %vm577, %v560, 0
  %v630 = vsel %vm577, %v561, 0
  %v633 = vsel %vm577, %v562, 0
  %v636 = vsel %vm577, %v563, 0
  %v639 = vsel %vm577, %v564, 0
  %v642 = vsel %vm577, %v565, 0
  %v645 = vsel %vm577, %v566, 0
  %v648 = vsel %vm577, %v567, 0
  %v651 = vsel %vm577, %v568, 0
  %v654 = vsel %vm577, %v569, 0
  %v657 = vsel %vm577, %v570, 0
  %v660 = vsel %vm577, %v571, 0
  %v663 = vsel %vm577, %v572, 0
  %v666 = vsel %vm577, %v573, 0
  %v669 = vsel %vm577, %v574, 0
  %v672 = vsel %vm577, %v575, 0
  %674 = vmatprep.subr.mxu0 0.0
  %675 = vmatpush1.msra.mxu0 0.0
  %676 = vmatprep.subr.mxu0 0.0
  %677 = vmatpush1.msra.mxu0 0.0
  %678 = vmatprep.subr.mxu0 0.0
  %679 = vmatpush1.msra.mxu0 0.0
  %680 = vmatprep.subr.mxu0 0.0
  %681 = vmatpush1.msra.mxu0 0.0
  %682 = vmatprep.subr.mxu0 0.0
  %683 = vmatpush1.msra.mxu0 0.0
  %684 = vmatprep.subr.mxu0 0.0
  %685 = vmatpush1.msra.mxu0 0.0
  %686 = vmatprep.subr.mxu0 0.0
  %687 = vmatpush1.msra.mxu0 0.0
  %688 = vmatprep.subr.mxu0 0.0
  %689 = vmatpush1.msra.mxu0 0.0
  %690 = vmatprep.subr.mxu0 0.0
  %691 = vmatpush1.msra.mxu0 0.0
  %692 = vmatprep.subr.mxu0 0.0
  %693 = vmatpush1.msra.mxu0 0.0
  %694 = vmatprep.subr.mxu0 0.0
  %695 = vmatpush1.msra.mxu0 0.0
  %696 = vmatprep.subr.mxu0 0.0
  %697 = vmatpush1.msra.mxu0 0.0
  %698 = vmatprep.subr.mxu0 0.0
  %699 = vmatpush1.msra.mxu0 0.0
  %700 = vmatprep.subr.mxu0 0.0
  %701 = vmatpush1.msra.mxu0 0.0
  %702 = vmatprep.subr.mxu0 0.0
  %703 = vmatpush1.msra.mxu0 0.0
  %704 = vmatprep.subr.mxu0 0.0
  %705 = vmatpush1.msra.mxu0 %v576
  %706 = vmatprep.subr.mxu0 0.0
  %707 = vmatpush2.msra.mxu0 0.0
  %708 = vmatprep.subr.mxu0 0.0
  %709 = vmatpush2.msra.mxu0 0.0
  %710 = vmatprep.subr.mxu0 0.0
  %711 = vmatpush2.msra.mxu0 0.0
  %712 = vmatprep.subr.mxu0 0.0
  %713 = vmatpush2.msra.mxu0 0.0
  %714 = vmatprep.subr.mxu0 0.0
  %715 = vmatpush2.msra.mxu0 0.0
  %716 = vmatprep.subr.mxu0 0.0
  %717 = vmatpush2.msra.mxu0 0.0
  %718 = vmatprep.subr.mxu0 0.0
  %719 = vmatpush2.msra.mxu0 0.0
  %720 = vmatprep.subr.mxu0 0.0
  %721 = vmatpush2.msra.mxu0 0.0
  %722 = vmatprep.subr.mxu0 0.0
  %723 = vmatpush2.msra.mxu0 0.0
  %724 = vmatprep.subr.mxu0 0.0
  %725 = vmatpush2.msra.mxu0 0.0
  %726 = vmatprep.subr.mxu0 0.0
  %727 = vmatpush2.msra.mxu0 0.0
  %728 = vmatprep.subr.mxu0 0.0
  %729 = vmatpush2.msra.mxu0 0.0
  %730 = vmatprep.subr.mxu0 0.0
  %731 = vmatpush2.msra.mxu0 0.0
  %732 = vmatprep.subr.mxu0 0.0
  %733 = vmatpush2.msra.mxu0 0.0
  %734 = vmatprep.subr.mxu0 0.0
  %735 = vmatpush2.msra.mxu0 0.0
  %736 = vmatprep.subr.mxu0 0.0
  %737 = vmatpush2.msra.mxu0 0.0
  %738 = vmatprep.mubr.f32.mxu0 0.0
  %739 = vmatmul.mubr.f32.gmra.mxu0 %v579
  %v740 = vpop.f32.mrf.mxu0
  %v741 = vadd.f32 0.0, %v740
  %v742 = vpop.f32.mrf.mxu0
  %743 = vmatprep.mubr.f32.mxu0 0.0
  %744 = vmatmul.mubr.f32.gmra.mxu0 %v582
  %v745 = vpop.f32.mrf.mxu0
  %v746 = vadd.f32 0.0, %v745
  %v747 = vpop.f32.mrf.mxu0
  %748 = vmatprep.mubr.f32.mxu0 0.0
  %749 = vmatmul.mubr.f32.gmra.mxu0 %v585
  %v750 = vpop.f32.mrf.mxu0
  %v751 = vadd.f32 0.0, %v750
  %v752 = vpop.f32.mrf.mxu0
  %753 = vmatprep.mubr.f32.mxu0 0.0
  %754 = vmatmul.mubr.f32.gmra.mxu0 %v588
  %v755 = vpop.f32.mrf.mxu0
  %v756 = vadd.f32 0.0, %v755
  %v757 = vpop.f32.mrf.mxu0
  %758 = vmatprep.mubr.f32.mxu0 0.0
  %759 = vmatmul.mubr.f32.gmra.mxu0 %v591
  %v760 = vpop.f32.mrf.mxu0
  %v761 = vadd.f32 0.0, %v760
  %v762 = vpop.f32.mrf.mxu0
  %763 = vmatprep.mubr.f32.mxu0 0.0
  %764 = vmatmul.mubr.f32.gmra.mxu0 %v594
  %v765 = vpop.f32.mrf.mxu0
  %v766 = vadd.f32 0.0, %v765
  %v767 = vpop.f32.mrf.mxu0
  %768 = vmatprep.mubr.f32.mxu0 0.0
  %769 = vmatmul.mubr.f32.gmra.mxu0 %v597
  %v770 = vpop.f32.mrf.mxu0
  %v771 = vadd.f32 0.0, %v770
  %v772 = vpop.f32.mrf.mxu0
  %773 = vmatprep.mubr.f32.mxu0 0.0
  %774 = vmatmul.mubr.f32.gmra.mxu0 %v600
  %v775 = vpop.f32.mrf.mxu0
  %v776 = vadd.f32 0.0, %v775
  %v777 = vpop.f32.mrf.mxu0
  %778 = vmatprep.mubr.f32.mxu0 0.0
  %779 = vmatmul.mubr.f32.gmra.mxu0 %v603
  %v780 = vpop.f32.mrf.mxu0
  %v781 = vadd.f32 0.0, %v780
  %v782 = vpop.f32.mrf.mxu0
  %783 = vmatprep.mubr.f32.mxu0 0.0
  %784 = vmatmul.mubr.f32.gmra.mxu0 %v606
  %v785 = vpop.f32.mrf.mxu0
  %v786 = vadd.f32 0.0, %v785
  %v787 = vpop.f32.mrf.mxu0
  %788 = vmatprep.mubr.f32.mxu0 0.0
  %789 = vmatmul.mubr.f32.gmra.mxu0 %v609
  %v790 = vpop.f32.mrf.mxu0
  %v791 = vadd.f32 0.0, %v790
  %v792 = vpop.f32.mrf.mxu0
  %793 = vmatprep.mubr.f32.mxu0 0.0
  %794 = vmatmul.mubr.f32.gmra.mxu0 %v612
  %v795 = vpop.f32.mrf.mxu0
  %v796 = vadd.f32 0.0, %v795
  %v797 = vpop.f32.mrf.mxu0
  %798 = vmatprep.mubr.f32.mxu0 0.0
  %799 = vmatmul.mubr.f32.gmra.mxu0 %v615
  %v800 = vpop.f32.mrf.mxu0
  %v801 = vadd.f32 0.0, %v800
  %v802 = vpop.f32.mrf.mxu0
  %803 = vmatprep.mubr.f32.mxu0 0.0
  %804 = vmatmul.mubr.f32.gmra.mxu0 %v618
  %v805 = vpop.f32.mrf.mxu0
  %v806 = vadd.f32 0.0, %v805
  %v807 = vpop.f32.mrf.mxu0
  %808 = vmatprep.mubr.f32.mxu0 0.0
  %809 = vmatmul.mubr.f32.gmra.mxu0 %v621
  %v810 = vpop.f32.mrf.mxu0
  %v811 = vadd.f32 0.0, %v810
  %v812 = vpop.f32.mrf.mxu0
  %813 = vmatprep.mubr.f32.mxu0 0.0
  %814 = vmatmul.mubr.f32.gmra.mxu0 %v624
  %v815 = vpop.f32.mrf.mxu0
  %v816 = vadd.f32 0.0, %v815
  %v817 = vpop.f32.mrf.mxu0
  %818 = vmatprep.mubr.f32.mxu0 0.0
  %819 = vmatmul.mubr.f32.gmra.mxu0 %v627
  %v820 = vpop.f32.mrf.mxu0
  %v821 = vadd.f32 0.0, %v820
  %v822 = vpop.f32.mrf.mxu0
  %823 = vmatprep.mubr.f32.mxu0 0.0
  %824 = vmatmul.mubr.f32.gmra.mxu0 %v630
  %v825 = vpop.f32.mrf.mxu0
  %v826 = vadd.f32 0.0, %v825
  %v827 = vpop.f32.mrf.mxu0
  %828 = vmatprep.mubr.f32.mxu0 0.0
  %829 = vmatmul.mubr.f32.gmra.mxu0 %v633
  %v830 = vpop.f32.mrf.mxu0
  %v831 = vadd.f32 0.0, %v830
  %v832 = vpop.f32.mrf.mxu0
  %833 = vmatprep.mubr.f32.mxu0 0.0
  %834 = vmatmul.mubr.f32.gmra.mxu0 %v636
  %v835 = vpop.f32.mrf.mxu0
  %v836 = vadd.f32 0.0, %v835
  %v837 = vpop.f32.mrf.mxu0
  %838 = vmatprep.mubr.f32.mxu0 0.0
  %839 = vmatmul.mubr.f32.gmra.mxu0 %v639
  %v840 = vpop.f32.mrf.mxu0
  %v841 = vadd.f32 0.0, %v840
  %v842 = vpop.f32.mrf.mxu0
  %843 = vmatprep.mubr.f32.mxu0 0.0
  %844 = vmatmul.mubr.f32.gmra.mxu0 %v642
  %v845 = vpop.f32.mrf.mxu0
  %v846 = vadd.f32 0.0, %v845
  %v847 = vpop.f32.mrf.mxu0
  %848 = vmatprep.mubr.f32.mxu0 0.0
  %849 = vmatmul.mubr.f32.gmra.mxu0 %v645
  %v850 = vpop.f32.mrf.mxu0
  %v851 = vadd.f32 0.0, %v850
  %v852 = vpop.f32.mrf.mxu0
  %853 = vmatprep.mubr.f32.mxu0 0.0
  %854 = vmatmul.mubr.f32.gmra.mxu0 %v648
  %v855 = vpop.f32.mrf.mxu0
  %v856 = vadd.f32 0.0, %v855
  %v857 = vpop.f32.mrf.mxu0
  %858 = vmatprep.mubr.f32.mxu0 0.0
  %859 = vmatmul.mubr.f32.gmra.mxu0 %v651
  %v860 = vpop.f32.mrf.mxu0
  %v861 = vadd.f32 0.0, %v860
  %v862 = vpop.f32.mrf.mxu0
  %863 = vmatprep.mubr.f32.mxu0 0.0
  %864 = vmatmul.mubr.f32.gmra.mxu0 %v654
  %v865 = vpop.f32.mrf.mxu0
  %v866 = vadd.f32 0.0, %v865
  %v867 = vpop.f32.mrf.mxu0
  %868 = vmatprep.mubr.f32.mxu0 0.0
  %869 = vmatmul.mubr.f32.gmra.mxu0 %v657
  %v870 = vpop.f32.mrf.mxu0
  %v871 = vadd.f32 0.0, %v870
  %v872 = vpop.f32.mrf.mxu0
  %873 = vmatprep.mubr.f32.mxu0 0.0
  %874 = vmatmul.mubr.f32.gmra.mxu0 %v660
  %v875 = vpop.f32.mrf.mxu0
  %v876 = vadd.f32 0.0, %v875
  %v877 = vpop.f32.mrf.mxu0
  %878 = vmatprep.mubr.f32.mxu0 0.0
  %879 = vmatmul.mubr.f32.gmra.mxu0 %v663
  %v880 = vpop.f32.mrf.mxu0
  %v881 = vadd.f32 0.0, %v880
  %v882 = vpop.f32.mrf.mxu0
  %883 = vmatprep.mubr.f32.mxu0 0.0
  %884 = vmatmul.mubr.f32.gmra.mxu0 %v666
  %v885 = vpop.f32.mrf.mxu0
  %v886 = vadd.f32 0.0, %v885
  %v887 = vpop.f32.mrf.mxu0
  %888 = vmatprep.mubr.f32.mxu0 0.0
  %889 = vmatmul.mubr.f32.gmra.mxu0 %v669
  %v890 = vpop.f32.mrf.mxu0
  %v891 = vadd.f32 0.0, %v890
  %v892 = vpop.f32.mrf.mxu0
  %893 = vmatprep.mubr.f32.mxu0 0.0
  %894 = vmatmul.mubr.f32.gmra.mxu0 %v672
  %v895 = vpop.f32.mrf.mxu0
  %v896 = vadd.f32 0.0, %v895
  %v897 = vpop.f32.mrf.mxu0
  %898 = vdwg.mxu0
  %v899 = vadd.f32 %v386, %v741
  %v900 = vadd.f32 %v391, %v746
  %v901 = vadd.f32 %v396, %v751
  %v902 = vadd.f32 %v401, %v756
  %v903 = vadd.f32 %v406, %v761
  %v904 = vadd.f32 %v411, %v766
  %v905 = vadd.f32 %v416, %v771
  %v906 = vadd.f32 %v421, %v776
  %v907 = vadd.f32 %v426, %v781
  %v908 = vadd.f32 %v431, %v786
  %v909 = vadd.f32 %v436, %v791
  %v910 = vadd.f32 %v441, %v796
  %v911 = vadd.f32 %v446, %v801
  %v912 = vadd.f32 %v451, %v806
  %v913 = vadd.f32 %v456, %v811
  %v914 = vadd.f32 %v461, %v816
  %v915 = vadd.f32 %v466, %v821
  %v916 = vadd.f32 %v471, %v826
  %v917 = vadd.f32 %v476, %v831
  %v918 = vadd.f32 %v481, %v836
  %v919 = vadd.f32 %v486, %v841
  %v920 = vadd.f32 %v491, %v846
  %v921 = vadd.f32 %v496, %v851
  %v922 = vadd.f32 %v501, %v856
  %v923 = vadd.f32 %v506, %v861
  %v924 = vadd.f32 %v511, %v866
  %v925 = vadd.f32 %v516, %v871
  %v926 = vadd.f32 %v521, %v876
  %v927 = vadd.f32 %v526, %v881
  %v928 = vadd.f32 %v531, %v886
  %v929 = vadd.f32 %v536, %v891
  %v930 = vadd.f32 %v541, %v896
  %v931 = vld [vmem:[%s6] sm:$0x1]
  %v933 = vlaneseq
  %v934 = vshrl.u32 %v933, 7
  %v935 = vsub.s32 0, %v934
  %v936 = vrot.slane %v931, %v935
  %v938 = vadd.f32 %v899, %v936
  %v939 = vadd.f32 %v900, %v936
  %v940 = vadd.f32 %v901, %v936
  %v941 = vadd.f32 %v902, %v936
  %v942 = vadd.f32 %v903, %v936
  %v943 = vadd.f32 %v904, %v936
  %v944 = vadd.f32 %v905, %v936
  %v945 = vadd.f32 %v906, %v936
  %v946 = vadd.f32 %v907, %v936
  %v947 = vadd.f32 %v908, %v936
  %v948 = vadd.f32 %v909, %v936
  %v949 = vadd.f32 %v910, %v936
  %v950 = vadd.f32 %v911, %v936
  %v951 = vadd.f32 %v912, %v936
  %v952 = vadd.f32 %v913, %v936
  %v953 = vadd.f32 %v914, %v936
  %v954 = vadd.f32 %v915, %v936
  %v955 = vadd.f32 %v916, %v936
  %v956 = vadd.f32 %v917, %v936
  %v957 = vadd.f32 %v918, %v936
  %v958 = vadd.f32 %v919, %v936
  %v959 = vadd.f32 %v920, %v936
  %v960 = vadd.f32 %v921, %v936
  %v961 = vadd.f32 %v922, %v936
  %v962 = vadd.f32 %v923, %v936
  %v963 = vadd.f32 %v924, %v936
  %v964 = vadd.f32 %v925, %v936
  %v965 = vadd.f32 %v926, %v936
  %v966 = vadd.f32 %v927, %v936
  %v967 = vadd.f32 %v928, %v936
  %v968 = vadd.f32 %v929, %v936
  %v969 = vadd.f32 %v930, %v936
  %v970 = vtanh.pop %v938
  %v971 = vtanh.pop %v939
  %v972 = vtanh.pop %v940
  %v973 = vtanh.pop %v941
  %v974 = vtanh.pop %v942
  %v975 = vtanh.pop %v943
  %v976 = vtanh.pop %v944
  %v977 = vtanh.pop %v945
  %v978 = vtanh.pop %v946
  %v979 = vtanh.pop %v947
  %v980 = vtanh.pop %v948
  %v981 = vtanh.pop %v949
  %v982 = vtanh.pop %v950
  %v983 = vtanh.pop %v951
  %v984 = vtanh.pop %v952
  %v985 = vtanh.pop %v953
  %v986 = vtanh.pop %v954
  %v987 = vtanh.pop %v955
  %v988 = vtanh.pop %v956
  %v989 = vtanh.pop %v957
  %v990 = vtanh.pop %v958
  %v991 = vtanh.pop %v959
  %v992 = vtanh.pop %v960
  %v993 = vtanh.pop %v961
  %v994 = vtanh.pop %v962
  %v995 = vtanh.pop %v963
  %v996 = vtanh.pop %v964
  %v997 = vtanh.pop %v965
  %v998 = vtanh.pop %v966
  %v999 = vtanh.pop %v967
  %v1000 = vtanh.pop %v968
  %v1001 = vtanh.pop %v969
  %v1002 = vld [vmem:[%s7] sm:$0xff]
  %v1003 = vld [vmem:[%s7 + $0x8] sm:$0xff]
  %v1004 = vld [vmem:[%s7 + $0x10] sm:$0xff]
  %v1005 = vld [vmem:[%s7 + $0x18] sm:$0xff]
  %v1006 = vld [vmem:[%s8] sm:$0x1]
  %v1008 = vlaneseq
  %v1009 = vshrl.u32 %v1008, 7
  %v1010 = vsub.s32 0, %v1009
  %v1011 = vrot.slane %v1006, %v1010
  %vm1013 = vcmask 261120
  %v1015 = vsel %vm1013, %v970, 0
  %v1018 = vsel %vm1013, %v971, 0
  %v1021 = vsel %vm1013, %v972, 0
  %v1024 = vsel %vm1013, %v973, 0
  %v1027 = vsel %vm1013, %v974, 0
  %v1030 = vsel %vm1013, %v975, 0
  %v1033 = vsel %vm1013, %v976, 0
  %v1036 = vsel %vm1013, %v977, 0
  %v1039 = vsel %vm1013, %v978, 0
  %v1042 = vsel %vm1013, %v979, 0
  %v1045 = vsel %vm1013, %v980, 0
  %v1048 = vsel %vm1013, %v981, 0
  %v1051 = vsel %vm1013, %v982, 0
  %v1054 = vsel %vm1013, %v983, 0
  %v1057 = vsel %vm1013, %v984, 0
  %v1060 = vsel %vm1013, %v985, 0
  %v1063 = vsel %vm1013, %v986, 0
  %v1066 = vsel %vm1013, %v987, 0
  %v1069 = vsel %vm1013, %v988, 0
  %v1072 = vsel %vm1013, %v989, 0
  %v1075 = vsel %vm1013, %v990, 0
  %v1078 = vsel %vm1013, %v991, 0
  %v1081 = vsel %vm1013, %v992, 0
  %v1084 = vsel %vm1013, %v993, 0
  %v1087 = vsel %vm1013, %v994, 0
  %v1090 = vsel %vm1013, %v995, 0
  %v1093 = vsel %vm1013, %v996, 0
  %v1096 = vsel %vm1013, %v997, 0
  %v1099 = vsel %vm1013, %v998, 0
  %v1102 = vsel %vm1013, %v999, 0
  %v1105 = vsel %vm1013, %v1000, 0
  %v1108 = vsel %vm1013, %v1001, 0
  %1110 = vmatprep.subr.mxu0 0.0
  %1111 = vmatpush1.msra.mxu0 0.0
  %1112 = vmatprep.subr.mxu0 0.0
  %1113 = vmatpush1.msra.mxu0 0.0
  %1114 = vmatprep.subr.mxu0 0.0
  %1115 = vmatpush1.msra.mxu0 0.0
  %1116 = vmatprep.subr.mxu0 0.0
  %1117 = vmatpush1.msra.mxu0 0.0
  %1118 = vmatprep.subr.mxu0 0.0
  %1119 = vmatpush1.msra.mxu0 0.0
  %1120 = vmatprep.subr.mxu0 0.0
  %1121 = vmatpush1.msra.mxu0 0.0
  %1122 = vmatprep.subr.mxu0 0.0
  %1123 = vmatpush1.msra.mxu0 0.0
  %1124 = vmatprep.subr.mxu0 0.0
  %1125 = vmatpush1.msra.mxu0 0.0
  %1126 = vmatprep.subr.mxu0 0.0
  %1127 = vmatpush1.msra.mxu0 0.0
  %1128 = vmatprep.subr.mxu0 0.0
  %1129 = vmatpush1.msra.mxu0 0.0
  %1130 = vmatprep.subr.mxu0 0.0
  %1131 = vmatpush1.msra.mxu0 0.0
  %1132 = vmatprep.subr.mxu0 0.0
  %1133 = vmatpush1.msra.mxu0 0.0
  %1134 = vmatprep.subr.mxu0 0.0
  %1135 = vmatpush1.msra.mxu0 %v1005
  %1136 = vmatprep.subr.mxu0 0.0
  %1137 = vmatpush1.msra.mxu0 %v1004
  %1138 = vmatprep.subr.mxu0 0.0
  %1139 = vmatpush1.msra.mxu0 %v1003
  %1140 = vmatprep.subr.mxu0 0.0
  %1141 = vmatpush1.msra.mxu0 %v1002
  %1142 = vmatprep.subr.mxu0 0.0
  %1143 = vmatpush2.msra.mxu0 0.0
  %1144 = vmatprep.subr.mxu0 0.0
  %1145 = vmatpush2.msra.mxu0 0.0
  %1146 = vmatprep.subr.mxu0 0.0
  %1147 = vmatpush2.msra.mxu0 0.0
  %1148 = vmatprep.subr.mxu0 0.0
  %1149 = vmatpush2.msra.mxu0 0.0
  %1150 = vmatprep.subr.mxu0 0.0
  %1151 = vmatpush2.msra.mxu0 0.0
  %1152 = vmatprep.subr.mxu0 0.0
  %1153 = vmatpush2.msra.mxu0 0.0
  %1154 = vmatprep.subr.mxu0 0.0
  %1155 = vmatpush2.msra.mxu0 0.0
  %1156 = vmatprep.subr.mxu0 0.0
  %1157 = vmatpush2.msra.mxu0 0.0
  %1158 = vmatprep.subr.mxu0 0.0
  %1159 = vmatpush2.msra.mxu0 0.0
  %1160 = vmatprep.subr.mxu0 0.0
  %1161 = vmatpush2.msra.mxu0 0.0
  %1162 = vmatprep.subr.mxu0 0.0
  %1163 = vmatpush2.msra.mxu0 0.0
  %1164 = vmatprep.subr.mxu0 0.0
  %1165 = vmatpush2.msra.mxu0 0.0
  %1166 = vmatprep.subr.mxu0 0.0
  %1167 = vmatpush2.msra.mxu0 0.0
  %1168 = vmatprep.subr.mxu0 0.0
  %1169 = vmatpush2.msra.mxu0 0.0
  %1170 = vmatprep.subr.mxu0 0.0
  %1171 = vmatpush2.msra.mxu0 0.0
  %1172 = vmatprep.subr.mxu0 0.0
  %1173 = vmatpush2.msra.mxu0 0.0
  %1174 = vmatprep.mubr.f32.mxu0 0.0
  %1175 = vmatmul.mubr.f32.gmra.mxu0 %v1015
  %v1176 = vpop.f32.mrf.mxu0
  %v1177 = vadd.f32 %v1011, %v1176
  %v1178 = vpop.f32.mrf.mxu0
  %1179 = vmatprep.mubr.f32.mxu0 0.0
  %1180 = vmatmul.mubr.f32.gmra.mxu0 %v1018
  %v1181 = vpop.f32.mrf.mxu0
  %v1182 = vadd.f32 %v1011, %v1181
  %v1183 = vpop.f32.mrf.mxu0
  %1184 = vmatprep.mubr.f32.mxu0 0.0
  %1185 = vmatmul.mubr.f32.gmra.mxu0 %v1021
  %v1186 = vpop.f32.mrf.mxu0
  %v1187 = vadd.f32 %v1011, %v1186
  %v1188 = vpop.f32.mrf.mxu0
  %1189 = vmatprep.mubr.f32.mxu0 0.0
  %1190 = vmatmul.mubr.f32.gmra.mxu0 %v1024
  %v1191 = vpop.f32.mrf.mxu0
  %v1192 = vadd.f32 %v1011, %v1191
  %v1193 = vpop.f32.mrf.mxu0
  %1194 = vmatprep.mubr.f32.mxu0 0.0
  %1195 = vmatmul.mubr.f32.gmra.mxu0 %v1027
  %v1196 = vpop.f32.mrf.mxu0
  %v1197 = vadd.f32 %v1011, %v1196
  %v1198 = vpop.f32.mrf.mxu0
  %1199 = vmatprep.mubr.f32.mxu0 0.0
  %1200 = vmatmul.mubr.f32.gmra.mxu0 %v1030
  %v1201 = vpop.f32.mrf.mxu0
  %v1202 = vadd.f32 %v1011, %v1201
  %v1203 = vpop.f32.mrf.mxu0
  %1204 = vmatprep.mubr.f32.mxu0 0.0
  %1205 = vmatmul.mubr.f32.gmra.mxu0 %v1033
  %v1206 = vpop.f32.mrf.mxu0
  %v1207 = vadd.f32 %v1011, %v1206
  %v1208 = vpop.f32.mrf.mxu0
  %1209 = vmatprep.mubr.f32.mxu0 0.0
  %1210 = vmatmul.mubr.f32.gmra.mxu0 %v1036
  %v1211 = vpop.f32.mrf.mxu0
  %v1212 = vadd.f32 %v1011, %v1211
  %v1213 = vpop.f32.mrf.mxu0
  %1214 = vmatprep.mubr.f32.mxu0 0.0
  %1215 = vmatmul.mubr.f32.gmra.mxu0 %v1039
  %v1216 = vpop.f32.mrf.mxu0
  %v1217 = vadd.f32 %v1011, %v1216
  %v1218 = vpop.f32.mrf.mxu0
  %1219 = vmatprep.mubr.f32.mxu0 0.0
  %1220 = vmatmul.mubr.f32.gmra.mxu0 %v1042
  %v1221 = vpop.f32.mrf.mxu0
  %v1222 = vadd.f32 %v1011, %v1221
  %v1223 = vpop.f32.mrf.mxu0
  %1224 = vmatprep.mubr.f32.mxu0 0.0
  %1225 = vmatmul.mubr.f32.gmra.mxu0 %v1045
  %v1226 = vpop.f32.mrf.mxu0
  %v1227 = vadd.f32 %v1011, %v1226
  %v1228 = vpop.f32.mrf.mxu0
  %1229 = vmatprep.mubr.f32.mxu0 0.0
  %1230 = vmatmul.mubr.f32.gmra.mxu0 %v1048
  %v1231 = vpop.f32.mrf.mxu0
  %v1232 = vadd.f32 %v1011, %v1231
  %v1233 = vpop.f32.mrf.mxu0
  %1234 = vmatprep.mubr.f32.mxu0 0.0
  %1235 = vmatmul.mubr.f32.gmra.mxu0 %v1051
  %v1236 = vpop.f32.mrf.mxu0
  %v1237 = vadd.f32 %v1011, %v1236
  %v1238 = vpop.f32.mrf.mxu0
  %1239 = vmatprep.mubr.f32.mxu0 0.0
  %1240 = vmatmul.mubr.f32.gmra.mxu0 %v1054
  %v1241 = vpop.f32.mrf.mxu0
  %v1242 = vadd.f32 %v1011, %v1241
  %v1243 = vpop.f32.mrf.mxu0
  %1244 = vmatprep.mubr.f32.mxu0 0.0
  %1245 = vmatmul.mubr.f32.gmra.mxu0 %v1057
  %v1246 = vpop.f32.mrf.mxu0
  %v1247 = vadd.f32 %v1011, %v1246
  %v1248 = vpop.f32.mrf.mxu0
  %1249 = vmatprep.mubr.f32.mxu0 0.0
  %1250 = vmatmul.mubr.f32.gmra.mxu0 %v1060
  %v1251 = vpop.f32.mrf.mxu0
  %v1252 = vadd.f32 %v1011, %v1251
  %v1253 = vpop.f32.mrf.mxu0
  %1254 = vmatprep.mubr.f32.mxu0 0.0
  %1255 = vmatmul.mubr.f32.gmra.mxu0 %v1063
  %v1256 = vpop.f32.mrf.mxu0
  %v1257 = vadd.f32 %v1011, %v1256
  %v1258 = vpop.f32.mrf.mxu0
  %1259 = vmatprep.mubr.f32.mxu0 0.0
  %1260 = vmatmul.mubr.f32.gmra.mxu0 %v1066
  %v1261 = vpop.f32.mrf.mxu0
  %v1262 = vadd.f32 %v1011, %v1261
  %v1263 = vpop.f32.mrf.mxu0
  %1264 = vmatprep.mubr.f32.mxu0 0.0
  %1265 = vmatmul.mubr.f32.gmra.mxu0 %v1069
  %v1266 = vpop.f32.mrf.mxu0
  %v1267 = vadd.f32 %v1011, %v1266
  %v1268 = vpop.f32.mrf.mxu0
  %1269 = vmatprep.mubr.f32.mxu0 0.0
  %1270 = vmatmul.mubr.f32.gmra.mxu0 %v1072
  %v1271 = vpop.f32.mrf.mxu0
  %v1272 = vadd.f32 %v1011, %v1271
  %v1273 = vpop.f32.mrf.mxu0
  %1274 = vmatprep.mubr.f32.mxu0 0.0
  %1275 = vmatmul.mubr.f32.gmra.mxu0 %v1075
  %v1276 = vpop.f32.mrf.mxu0
  %v1277 = vadd.f32 %v1011, %v1276
  %v1278 = vpop.f32.mrf.mxu0
  %1279 = vmatprep.mubr.f32.mxu0 0.0
  %1280 = vmatmul.mubr.f32.gmra.mxu0 %v1078
  %v1281 = vpop.f32.mrf.mxu0
  %v1282 = vadd.f32 %v1011, %v1281
  %v1283 = vpop.f32.mrf.mxu0
  %1284 = vmatprep.mubr.f32.mxu0 0.0
  %1285 = vmatmul.mubr.f32.gmra.mxu0 %v1081
  %v1286 = vpop.f32.mrf.mxu0
  %v1287 = vadd.f32 %v1011, %v1286
  %v1288 = vpop.f32.mrf.mxu0
  %1289 = vmatprep.mubr.f32.mxu0 0.0
  %1290 = vmatmul.mubr.f32.gmra.mxu0 %v1084
  %v1291 = vpop.f32.mrf.mxu0
  %v1292 = vadd.f32 %v1011, %v1291
  %v1293 = vpop.f32.mrf.mxu0
  %1294 = vmatprep.mubr.f32.mxu0 0.0
  %1295 = vmatmul.mubr.f32.gmra.mxu0 %v1087
  %v1296 = vpop.f32.mrf.mxu0
  %v1297 = vadd.f32 %v1011, %v1296
  %v1298 = vpop.f32.mrf.mxu0
  %1299 = vmatprep.mubr.f32.mxu0 0.0
  %1300 = vmatmul.mubr.f32.gmra.mxu0 %v1090
  %v1301 = vpop.f32.mrf.mxu0
  %v1302 = vadd.f32 %v1011, %v1301
  %v1303 = vpop.f32.mrf.mxu0
  %1304 = vmatprep.mubr.f32.mxu0 0.0
  %1305 = vmatmul.mubr.f32.gmra.mxu0 %v1093
  %v1306 = vpop.f32.mrf.mxu0
  %v1307 = vadd.f32 %v1011, %v1306
  %v1308 = vpop.f32.mrf.mxu0
  %1309 = vmatprep.mubr.f32.mxu0 0.0
  %1310 = vmatmul.mubr.f32.gmra.mxu0 %v1096
  %v1311 = vpop.f32.mrf.mxu0
  %v1312 = vadd.f32 %v1011, %v1311
  %v1313 = vpop.f32.mrf.mxu0
  %1314 = vmatprep.mubr.f32.mxu0 0.0
  %1315 = vmatmul.mubr.f32.gmra.mxu0 %v1099
  %v1316 = vpop.f32.mrf.mxu0
  %v1317 = vadd.f32 %v1011, %v1316
  %v1318 = vpop.f32.mrf.mxu0
  %1319 = vmatprep.mubr.f32.mxu0 0.0
  %1320 = vmatmul.mubr.f32.gmra.mxu0 %v1102
  %v1321 = vpop.f32.mrf.mxu0
  %v1322 = vadd.f32 %v1011, %v1321
  %v1323 = vpop.f32.mrf.mxu0
  %1324 = vmatprep.mubr.f32.mxu0 0.0
  %1325 = vmatmul.mubr.f32.gmra.mxu0 %v1105
  %v1326 = vpop.f32.mrf.mxu0
  %v1327 = vadd.f32 %v1011, %v1326
  %v1328 = vpop.f32.mrf.mxu0
  %1329 = vmatprep.mubr.f32.mxu0 0.0
  %1330 = vmatmul.mubr.f32.gmra.mxu0 %v1108
  %v1331 = vpop.f32.mrf.mxu0
  %v1332 = vadd.f32 %v1011, %v1331
  %v1333 = vpop.f32.mrf.mxu0
  %1334 = vdwg.mxu0
  %v1335 = vtanh.pop %v1177
  %v1336 = vtanh.pop %v1182
  %v1337 = vtanh.pop %v1187
  %v1338 = vtanh.pop %v1192
  %v1339 = vtanh.pop %v1197
  %v1340 = vtanh.pop %v1202
  %v1341 = vtanh.pop %v1207
  %v1342 = vtanh.pop %v1212
  %v1343 = vtanh.pop %v1217
  %v1344 = vtanh.pop %v1222
  %v1345 = vtanh.pop %v1227
  %v1346 = vtanh.pop %v1232
  %v1347 = vtanh.pop %v1237
  %v1348 = vtanh.pop %v1242
  %v1349 = vtanh.pop %v1247
  %v1350 = vtanh.pop %v1252
  %v1351 = vtanh.pop %v1257
  %v1352 = vtanh.pop %v1262
  %v1353 = vtanh.pop %v1267
  %v1354 = vtanh.pop %v1272
  %v1355 = vtanh.pop %v1277
  %v1356 = vtanh.pop %v1282
  %v1357 = vtanh.pop %v1287
  %v1358 = vtanh.pop %v1292
  %v1359 = vtanh.pop %v1297
  %v1360 = vtanh.pop %v1302
  %v1361 = vtanh.pop %v1307
  %v1362 = vtanh.pop %v1312
  %v1363 = vtanh.pop %v1317
  %v1364 = vtanh.pop %v1322
  %v1365 = vtanh.pop %v1327
  %v1366 = vtanh.pop %v1332
  %v1367 = vld [vmem:[%s9] sm:$0x1]
  %v1369 = vlaneseq
  %v1370 = vshrl.u32 %v1369, 7
  %v1371 = vsub.s32 0, %v1370
  %v1372 = vrot.slane %v1367, %v1371
  %v1374 = vmul.f32 %v1335, %v1372
  %v1375 = vmul.f32 %v1336, %v1372
  %v1376 = vmul.f32 %v1337, %v1372
  %v1377 = vmul.f32 %v1338, %v1372
  %v1378 = vmul.f32 %v1339, %v1372
  %v1379 = vmul.f32 %v1340, %v1372
  %v1380 = vmul.f32 %v1341, %v1372
  %v1381 = vmul.f32 %v1342, %v1372
  %v1382 = vmul.f32 %v1343, %v1372
  %v1383 = vmul.f32 %v1344, %v1372
  %v1384 = vmul.f32 %v1345, %v1372
  %v1385 = vmul.f32 %v1346, %v1372
  %v1386 = vmul.f32 %v1347, %v1372
  %v1387 = vmul.f32 %v1348, %v1372
  %v1388 = vmul.f32 %v1349, %v1372
  %v1389 = vmul.f32 %v1350, %v1372
  %v1390 = vmul.f32 %v1351, %v1372
  %v1391 = vmul.f32 %v1352, %v1372
  %v1392 = vmul.f32 %v1353, %v1372
  %v1393 = vmul.f32 %v1354, %v1372
  %v1394 = vmul.f32 %v1355, %v1372
  %v1395 = vmul.f32 %v1356, %v1372
  %v1396 = vmul.f32 %v1357, %v1372
  %v1397 = vmul.f32 %v1358, %v1372
  %v1398 = vmul.f32 %v1359, %v1372
  %v1399 = vmul.f32 %v1360, %v1372
  %v1400 = vmul.f32 %v1361, %v1372
  %v1401 = vmul.f32 %v1362, %v1372
  %v1402 = vmul.f32 %v1363, %v1372
  %v1403 = vmul.f32 %v1364, %v1372
  %v1404 = vmul.f32 %v1365, %v1372
  %v1405 = vmul.f32 %v1366, %v1372
  %v1406 = vsel %vm1013, %v1374, 0.0
  %1407 = vadd.xlane.f32.xlu0 %v1406
  %v1408 = vpop.xlane.xlu0 %1407
  %v1409 = vsel %vm1013, %v1375, 0.0
  %1410 = vadd.xlane.f32.xlu0 %v1409
  %v1411 = vpop.xlane.xlu0 %1410
  %v1412 = vsel %vm1013, %v1376, 0.0
  %1413 = vadd.xlane.f32.xlu0 %v1412
  %v1414 = vpop.xlane.xlu0 %1413
  %v1415 = vsel %vm1013, %v1377, 0.0
  %1416 = vadd.xlane.f32.xlu0 %v1415
  %v1417 = vpop.xlane.xlu0 %1416
  %v1418 = vsel %vm1013, %v1378, 0.0
  %1419 = vadd.xlane.f32.xlu0 %v1418
  %v1420 = vpop.xlane.xlu0 %1419
  %v1421 = vsel %vm1013, %v1379, 0.0
  %1422 = vadd.xlane.f32.xlu0 %v1421
  %v1423 = vpop.xlane.xlu0 %1422
  %v1424 = vsel %vm1013, %v1380, 0.0
  %1425 = vadd.xlane.f32.xlu0 %v1424
  %v1426 = vpop.xlane.xlu0 %1425
  %v1427 = vsel %vm1013, %v1381, 0.0
  %1428 = vadd.xlane.f32.xlu0 %v1427
  %v1429 = vpop.xlane.xlu0 %1428
  %v1430 = vsel %vm1013, %v1382, 0.0
  %1431 = vadd.xlane.f32.xlu0 %v1430
  %v1432 = vpop.xlane.xlu0 %1431
  %v1433 = vsel %vm1013, %v1383, 0.0
  %1434 = vadd.xlane.f32.xlu0 %v1433
  %v1435 = vpop.xlane.xlu0 %1434
  %v1436 = vsel %vm1013, %v1384, 0.0
  %1437 = vadd.xlane.f32.xlu0 %v1436
  %v1438 = vpop.xlane.xlu0 %1437
  %v1439 = vsel %vm1013, %v1385, 0.0
  %1440 = vadd.xlane.f32.xlu0 %v1439
  %v1441 = vpop.xlane.xlu0 %1440
  %v1442 = vsel %vm1013, %v1386, 0.0
  %1443 = vadd.xlane.f32.xlu0 %v1442
  %v1444 = vpop.xlane.xlu0 %1443
  %v1445 = vsel %vm1013, %v1387, 0.0
  %1446 = vadd.xlane.f32.xlu0 %v1445
  %v1447 = vpop.xlane.xlu0 %1446
  %v1448 = vsel %vm1013, %v1388, 0.0
  %1449 = vadd.xlane.f32.xlu0 %v1448
  %v1450 = vpop.xlane.xlu0 %1449
  %v1451 = vsel %vm1013, %v1389, 0.0
  %1452 = vadd.xlane.f32.xlu0 %v1451
  %v1453 = vpop.xlane.xlu0 %1452
  %v1454 = vsel %vm1013, %v1390, 0.0
  %1455 = vadd.xlane.f32.xlu0 %v1454
  %v1456 = vpop.xlane.xlu0 %1455
  %v1457 = vsel %vm1013, %v1391, 0.0
  %1458 = vadd.xlane.f32.xlu0 %v1457
  %v1459 = vpop.xlane.xlu0 %1458
  %v1460 = vsel %vm1013, %v1392, 0.0
  %1461 = vadd.xlane.f32.xlu0 %v1460
  %v1462 = vpop.xlane.xlu0 %1461
  %v1463 = vsel %vm1013, %v1393, 0.0
  %1464 = vadd.xlane.f32.xlu0 %v1463
  %v1465 = vpop.xlane.xlu0 %1464
  %v1466 = vsel %vm1013, %v1394, 0.0
  %1467 = vadd.xlane.f32.xlu0 %v1466
  %v1468 = vpop.xlane.xlu0 %1467
  %v1469 = vsel %vm1013, %v1395, 0.0
  %1470 = vadd.xlane.f32.xlu0 %v1469
  %v1471 = vpop.xlane.xlu0 %1470
  %v1472 = vsel %vm1013, %v1396, 0.0
  %1473 = vadd.xlane.f32.xlu0 %v1472
  %v1474 = vpop.xlane.xlu0 %1473
  %v1475 = vsel %vm1013, %v1397, 0.0
  %1476 = vadd.xlane.f32.xlu0 %v1475
  %v1477 = vpop.xlane.xlu0 %1476
  %v1478 = vsel %vm1013, %v1398, 0.0
  %1479 = vadd.xlane.f32.xlu0 %v1478
  %v1480 = vpop.xlane.xlu0 %1479
  %v1481 = vsel %vm1013, %v1399, 0.0
  %1482 = vadd.xlane.f32.xlu0 %v1481
  %v1483 = vpop.xlane.xlu0 %1482
  %v1484 = vsel %vm1013, %v1400, 0.0
  %1485 = vadd.xlane.f32.xlu0 %v1484
  %v1486 = vpop.xlane.xlu0 %1485
  %v1487 = vsel %vm1013, %v1401, 0.0
  %1488 = vadd.xlane.f32.xlu0 %v1487
  %v1489 = vpop.xlane.xlu0 %1488
  %v1490 = vsel %vm1013, %v1402, 0.0
  %1491 = vadd.xlane.f32.xlu0 %v1490
  %v1492 = vpop.xlane.xlu0 %1491
  %v1493 = vsel %vm1013, %v1403, 0.0
  %1494 = vadd.xlane.f32.xlu0 %v1493
  %v1495 = vpop.xlane.xlu0 %1494
  %v1496 = vsel %vm1013, %v1404, 0.0
  %1497 = vadd.xlane.f32.xlu0 %v1496
  %v1498 = vpop.xlane.xlu0 %1497
  %v1499 = vsel %vm1013, %v1405, 0.0
  %1500 = vadd.xlane.f32.xlu0 %v1499
  %v1501 = vpop.xlane.xlu0 %1500
  %v1502 = vld [vmem:[#allocation2] sm:$0x1]
  %v1504 = vlaneseq
  %v1505 = vshrl.u32 %v1504, 7
  %v1506 = vsub.s32 0, %v1505
  %v1507 = vrot.slane %v1502, %v1506
  %v1509 = vadd.f32 %v1408, %v1507
  %v1510 = vadd.f32 %v1411, %v1507
  %v1511 = vadd.f32 %v1414, %v1507
  %v1512 = vadd.f32 %v1417, %v1507
  %v1513 = vadd.f32 %v1420, %v1507
  %v1514 = vadd.f32 %v1423, %v1507
  %v1515 = vadd.f32 %v1426, %v1507
  %v1516 = vadd.f32 %v1429, %v1507
  %v1517 = vadd.f32 %v1432, %v1507
  %v1518 = vadd.f32 %v1435, %v1507
  %v1519 = vadd.f32 %v1438, %v1507
  %v1520 = vadd.f32 %v1441, %v1507
  %v1521 = vadd.f32 %v1444, %v1507
  %v1522 = vadd.f32 %v1447, %v1507
  %v1523 = vadd.f32 %v1450, %v1507
  %v1524 = vadd.f32 %v1453, %v1507
  %v1525 = vadd.f32 %v1456, %v1507
  %v1526 = vadd.f32 %v1459, %v1507
  %v1527 = vadd.f32 %v1462, %v1507
  %v1528 = vadd.f32 %v1465, %v1507
  %v1529 = vadd.f32 %v1468, %v1507
  %v1530 = vadd.f32 %v1471, %v1507
  %v1531 = vadd.f32 %v1474, %v1507
  %v1532 = vadd.f32 %v1477, %v1507
  %v1533 = vadd.f32 %v1480, %v1507
  %v1534 = vadd.f32 %v1483, %v1507
  %v1535 = vadd.f32 %v1486, %v1507
  %v1536 = vadd.f32 %v1489, %v1507
  %v1537 = vadd.f32 %v1492, %v1507
  %v1538 = vadd.f32 %v1495, %v1507
  %v1539 = vadd.f32 %v1498, %v1507
  %v1540 = vadd.f32 %v1501, %v1507
  %vm1541 = vcmask 7168
  %1542 = vst.msk [vmem:[%s11] sm:$0xff] %vm1541, %v1509
  %1543 = vst.msk [vmem:[%s11 + $0x8] sm:$0xff] %vm1541, %v1510
  %1544 = vst.msk [vmem:[%s11 + $0x10] sm:$0xff] %vm1541, %v1511
  %1545 = vst.msk [vmem:[%s11 + $0x18] sm:$0xff] %vm1541, %v1512
  %1546 = vst.msk [vmem:[%s11 + $0x20] sm:$0xff] %vm1541, %v1513
  %1547 = vst.msk [vmem:[%s11 + $0x28] sm:$0xff] %vm1541, %v1514
  %1548 = vst.msk [vmem:[%s11 + $0x30] sm:$0xff] %vm1541, %v1515
  %1549 = vst.msk [vmem:[%s11 + $0x38] sm:$0xff] %vm1541, %v1516
  %1550 = vst.msk [vmem:[%s11 + $0x40] sm:$0xff] %vm1541, %v1517
  %1551 = vst.msk [vmem:[%s11 + $0x48] sm:$0xff] %vm1541, %v1518
  %1552 = vst.msk [vmem:[%s11 + $0x50] sm:$0xff] %vm1541, %v1519
  %1553 = vst.msk [vmem:[%s11 + $0x58] sm:$0xff] %vm1541, %v1520
  %1554 = vst.msk [vmem:[%s11 + $0x60] sm:$0xff] %vm1541, %v1521
  %1555 = vst.msk [vmem:[%s11 + $0x68] sm:$0xff] %vm1541, %v1522
  %1556 = vst.msk [vmem:[%s11 + $0x70] sm:$0xff] %vm1541, %v1523
  %1557 = vst.msk [vmem:[%s11 + $0x78] sm:$0xff] %vm1541, %v1524
  %1558 = vst.msk [vmem:[%s11 + $0x80] sm:$0xff] %vm1541, %v1525
  %1559 = vst.msk [vmem:[%s11 + $0x88] sm:$0xff] %vm1541, %v1526
  %1560 = vst.msk [vmem:[%s11 + $0x90] sm:$0xff] %vm1541, %v1527
  %1561 = vst.msk [vmem:[%s11 + $0x98] sm:$0xff] %vm1541, %v1528
  %1562 = vst.msk [vmem:[%s11 + $0xa0] sm:$0xff] %vm1541, %v1529
  %1563 = vst.msk [vmem:[%s11 + $0xa8] sm:$0xff] %vm1541, %v1530
  %1564 = vst.msk [vmem:[%s11 + $0xb0] sm:$0xff] %vm1541, %v1531
  %1565 = vst.msk [vmem:[%s11 + $0xb8] sm:$0xff] %vm1541, %v1532
  %1566 = vst.msk [vmem:[%s11 + $0xc0] sm:$0xff] %vm1541, %v1533
  %1567 = vst.msk [vmem:[%s11 + $0xc8] sm:$0xff] %vm1541, %v1534
  %1568 = vst.msk [vmem:[%s11 + $0xd0] sm:$0xff] %vm1541, %v1535
  %1569 = vst.msk [vmem:[%s11 + $0xd8] sm:$0xff] %vm1541, %v1536
  %1570 = vst.msk [vmem:[%s11 + $0xe0] sm:$0xff] %vm1541, %v1537
  %1571 = vst.msk [vmem:[%s11 + $0xe8] sm:$0xff] %vm1541, %v1538
  %1572 = vst.msk [vmem:[%s11 + $0xf0] sm:$0xff] %vm1541, %v1539
  %1573 = vst.msk [vmem:[%s11 + $0xf8] sm:$0xff] %vm1541, %v1540
  // Predicated region
  $region46: #{critic_squeeze_head.1} parent=0 // pred_check
    _
  $region47: #{critic_squeeze_head.1} parent=0 // pred_check_branch
    %1575 = sbr.rel (0) target = $region49
  $region48: #{critic_squeeze_head.1} parent=0 // pred_region
    _
  $region49: #{critic_squeeze_head.1} parent=0 // pred_fallthru
    _
  // Predicated region
  $region50: #{critic_squeeze_head.1} parent=0 // pred_check
    _
  $region51: #{critic_squeeze_head.1} parent=0 // pred_check_branch
    %1577 = sbr.rel (0) target = $region53
  $region52: #{critic_squeeze_head.1} parent=0 // pred_region
    _
  $region53: #{critic_squeeze_head.1} parent=0 // pred_fallthru
    _

</llo_original>
